<compile_context>
chip_gen: v5e
topology: v5e:2x2
jax: 0.10.0
libtpu: 0.0.40
codegen_flags: <defaults>
</compile_context>

<pallas_src>
import jax
import jax.numpy as jnp
from jax.experimental import pallas as pl
from jax.experimental.pallas import tpu as pltpu


def _round_up(n, m):
    return ((n + m - 1) // m) * m


def gru_model_forward(x, params):
    """x: (S, B, I) float32.  params in PyTorch layout (see __main__).  Returns (S, B, O)."""
    S, B, I = x.shape
    H = params["w_hh"].shape[1]
    O = params["fc_w"].shape[0]

    Bp = _round_up(max(B, 8), 8)          # pad batch to sublane width
    HP = _round_up(max(H, 128), 128)      # per-gate lane padding (aligned gate blocks)
    OP = _round_up(max(O, 128), 128)      # pad output to lane width (lane-dense store)
    G = 3 * HP                            # fused gate-slab width
    f32 = jnp.float32

    # ---------- one-time parameter prep (cheap XLA ops, fused under jit) ----------
    w_ih = params["w_ih"].astype(f32)     # (3H, I)  gate order: r, z, n
    w_hh = params["w_hh"].astype(f32)     # (3H, H)
    b_ih = params["b_ih"].astype(f32)     # (3H,)
    b_hh = params["b_hh"].astype(f32)     # (3H,)

    # per-gate, pre-transposed weights, packed into ONE fused matrix each,
    # with every gate living in its own 128-lane-aligned block
    wi_cat = jnp.zeros((I, G), f32)
    wh_cat = jnp.zeros((H, G), f32)
    for g in range(3):
        wi_cat = wi_cat.at[:, g * HP:g * HP + H].set(w_ih[g * H:(g + 1) * H].T)
        wh_cat = wh_cat.at[:, g * HP:g * HP + H].set(w_hh[g * H:(g + 1) * H].T)

    # fold input+hidden biases for r/z gates; b_hn must stay inside r*(...)
    br = b_ih[0 * H:1 * H] + b_hh[0 * H:1 * H]
    bz = b_ih[1 * H:2 * H] + b_hh[1 * H:2 * H]
    bn = b_ih[2 * H:3 * H]
    bhn = b_hh[2 * H:3 * H]

    # one sublane-packed array for ALL small params (one DMA instead of seven):
    #   row 0: fused input-projection bias [br | bz | bn], each in its HP block
    #   row 1: b_hn          (first H lanes valid)
    #   row 2: LayerNorm w   (first H lanes valid)
    #   row 3: LayerNorm b   (first H lanes valid)
    #   row 4: FC bias       (first O lanes valid)
    small = jnp.zeros((8, G), f32)
    small = small.at[0, 0 * HP:0 * HP + H].set(br)
    small = small.at[0, 1 * HP:1 * HP + H].set(bz)
    small = small.at[0, 2 * HP:2 * HP + H].set(bn)
    small = small.at[1, :H].set(bhn)
    small = small.at[2, :H].set(params["ln_w"].astype(f32))
    small = small.at[3, :H].set(params["ln_b"].astype(f32))
    small = small.at[4, :O].set(params["fc_b"].astype(f32))

    fcw = jnp.zeros((H, OP), f32).at[:, :O].set(params["fc_w"].astype(f32).T)

    # pad batch and flatten time into rows: (S, Bp, I) -> (S*Bp, I)
    xp = jnp.zeros((S, Bp, I), f32).at[:, :B, :].set(x.astype(f32))
    x2d = xp.reshape(S * Bp, I)

    def kernel(x_ref, wi_ref, wh_ref, fcw_ref, small_ref, out_ref, g_s, hs_s):
        # small-parameter rows (single packed DMA), loaded/broadcast once
        bi = small_ref[0:1, :]                                   # (1, G)
        bhn_b = jnp.broadcast_to(small_ref[1:2, :H], (Bp, H))    # hoisted broadcast
        lnw = small_ref[2:3, :H]
        lnb = small_ref[3:4, :H]
        fcb = small_ref[4:5, :OP]

        # ---- fused non-recurrent input projection: ONE matmul + ONE bias add ----
        g_s[...] = jnp.dot(x_ref[...], wi_ref[...],
                           preferred_element_type=jnp.float32) + bi

        wh = wh_ref[...]                                         # (H, G) fused recurrent weights

        # ---- sequential recurrence: ONE (Bp,H)@(H,3*HP) matmul per step ----
        def step(t, h):
            off = pl.multiple_of(t * Bp, Bp)
            a = g_s[pl.ds(off, Bp), :]                           # (Bp, G) precomputed input term
            gh = jnp.dot(h, wh, preferred_element_type=jnp.float32)
            # lane-aligned gate extraction (each gate starts at a 128-lane boundary)
            r = jax.nn.sigmoid(a[:, 0 * HP:0 * HP + H] + gh[:, 0 * HP:0 * HP + H])
            z = jax.nn.sigmoid(a[:, 1 * HP:1 * HP + H] + gh[:, 1 * HP:1 * HP + H])
            n = jnp.tanh(a[:, 2 * HP:2 * HP + H]
                         + r * (gh[:, 2 * HP:2 * HP + H] + bhn_b))
            h_new = n + z * (h - n)                              # == (1-z)*n + z*h
            hs_s[pl.ds(off, Bp), :] = h_new
            return h_new

        jax.lax.fori_loop(0, S, step, jnp.zeros((Bp, H), jnp.float32),
                          unroll=min(S, 8))                      # bounded unroll for long S

        # ---- batched epilogue: LayerNorm + Linear + Sigmoid over the whole slab ----
        hs = hs_s[...]                                           # (S*Bp, H)
        mean = jnp.mean(hs, axis=-1, keepdims=True)
        var = jnp.mean(jnp.square(hs - mean), axis=-1, keepdims=True)
        y = (hs - mean) * jax.lax.rsqrt(var + 1e-5)
        y = y * lnw + lnb
        # Dropout is identity in the eval-mode forward pass.
        logits = jnp.dot(y, fcw_ref[...],
                         preferred_element_type=jnp.float32) + fcb
        out_ref[...] = jax.nn.sigmoid(logits)                    # one lane-dense store

    def full(shape):
        return pl.BlockSpec(shape, lambda i: (0,) * len(shape))

    # resident VMEM footprint (bytes) -> explicit, generous limit (tiny here)
    vmem_bytes = 4 * (S * Bp * I + I * G + H * G + 8 * G + H * OP
                      + S * Bp * OP + S * Bp * G + S * Bp * H)
    vmem_limit = int(min(max(4 * vmem_bytes, 16 << 20), 64 << 20))

    out = pl.pallas_call(
        kernel,
        out_shape=jax.ShapeDtypeStruct((S * Bp, OP), f32),
        grid=(1,),
        in_specs=[
            full((S * Bp, I)),     # x slab
            full((I, G)),          # fused input-projection weights
            full((H, G)),          # fused recurrent weights
            full((H, OP)),         # FC weights
            full((8, G)),          # packed small params
        ],
        out_specs=full((S * Bp, OP)),
        scratch_shapes=[
            pltpu.VMEM((S * Bp, G), f32),   # fused gate input pre-activations
            pltpu.VMEM((S * Bp, H), f32),   # all hidden states h_t
        ],
        compiler_params=pltpu.CompilerParams(
            dimension_semantics=("arbitrary",),
            vmem_limit_bytes=vmem_limit),
    )(x2d, wi_cat, wh_cat, fcw, small)

    return out.reshape(S, Bp, OP)[:, :B, :O]


def reference_forward(x, params):
    """Pure-JAX reference mirroring PyTorch GRU -> LayerNorm -> Linear -> Sigmoid (eval)."""
    S, B, I = x.shape
    H = params["w_hh"].shape[1]
    w_ih_t = params["w_ih"].T            # (I, 3H)
    w_hh_t = params["w_hh"].T            # (H, 3H)
    b_ih, b_hh = params["b_ih"], params["b_hh"]

    def step(h, x_t):
        gi = x_t @ w_ih_t + b_ih
        gh = h @ w_hh_t + b_hh
        r = jax.nn.sigmoid(gi[:, :H] + gh[:, :H])
        z = jax.nn.sigmoid(gi[:, H:2 * H] + gh[:, H:2 * H])
        n = jnp.tanh(gi[:, 2 * H:] + r * gh[:, 2 * H:])
        h_new = (1.0 - z) * n + z * h
        return h_new, h_new

    h0 = jnp.zeros((B, H), jnp.float32)
    _, hs = jax.lax.scan(step, h0, x)                   # (S, B, H)
    mean = jnp.mean(hs, axis=-1, keepdims=True)
    var = jnp.mean((hs - mean) ** 2, axis=-1, keepdims=True)
    y = (hs - mean) * jax.lax.rsqrt(var + 1e-5)
    y = y * params["ln_w"] + params["ln_b"]
    out = y @ params["fc_w"].T + params["fc_b"]
    return jax.nn.sigmoid(out)


if __name__ == "__main__":
    # Small shapes consistent with the module: seq_len=8, batch=4, input=16, hidden=32, out=8
    S, B = 8, 4
    I, H, O = 16, 32, 8

    key = jax.random.PRNGKey(0)
    ks = jax.random.split(key, 7)
    scale = 1.0 / jnp.sqrt(H)

    params = {
        # PyTorch layouts: weight_ih_l0 (3H, I), weight_hh_l0 (3H, H), biases (3H,)
        "w_ih": jax.random.uniform(ks[0], (3 * H, I), jnp.float32, -scale, scale),
        "w_hh": jax.random.uniform(ks[1], (3 * H, H), jnp.float32, -scale, scale),
        "b_ih": jax.random.uniform(ks[2], (3 * H,), jnp.float32, -scale, scale),
        "b_hh": jax.random.uniform(ks[3], (3 * H,), jnp.float32, -scale, scale),
        "ln_w": jnp.ones((H,), jnp.float32),
        "ln_b": jnp.zeros((H,), jnp.float32),
        "fc_w": jax.random.uniform(ks[4], (O, H), jnp.float32, -scale, scale),
        "fc_b": jax.random.uniform(ks[5], (O,), jnp.float32, -scale, scale),
    }
    x = jax.random.normal(ks[6], (S, B, I), jnp.float32)

    fwd = jax.jit(gru_model_forward)
    out = jax.block_until_ready(fwd(x, params))

    ref = reference_forward(x, params)
    assert out.shape == (S, B, O)
    assert jnp.allclose(out, ref, atol=1e-5, rtol=1e-5), "mismatch vs JAX reference"

    print("KERNEL_OK")
</pallas_src>

<mosaic_0001>
module attributes {stable_mosaic.version = 11 : i64} {
  func.func @kernel(%arg0: i32, %arg1: memref<64x16xf32, #tpu.memory_space<vmem>>, %arg2: memref<16x384xf32, #tpu.memory_space<vmem>>, %arg3: memref<32x384xf32, #tpu.memory_space<vmem>>, %arg4: memref<32x128xf32, #tpu.memory_space<vmem>>, %arg5: memref<8x384xf32, #tpu.memory_space<vmem>>, %arg6: memref<64x128xf32, #tpu.memory_space<vmem>>, %arg7: memref<64x384xf32, #tpu.memory_space<vmem>>, %arg8: memref<64x32xf32, #tpu.memory_space<vmem>>) attributes {dimension_semantics = [#tpu.dimension_semantics<arbitrary>], iteration_bounds = array<i64: 1>, scalar_prefetch = 0 : i64, scratch_operands = 2 : i64, tpu.core_type = #tpu.core_type<tc>, window_params = [{pipeline_mode = #tpu.pipeline_mode<synchronous>, transform_indices = @transform_0, window_bounds = array<i64: 64, 16>}, {pipeline_mode = #tpu.pipeline_mode<synchronous>, transform_indices = @transform_1, window_bounds = array<i64: 16, 384>}, {pipeline_mode = #tpu.pipeline_mode<synchronous>, transform_indices = @transform_2, window_bounds = array<i64: 32, 384>}, {pipeline_mode = #tpu.pipeline_mode<synchronous>, transform_indices = @transform_3, window_bounds = array<i64: 32, 128>}, {pipeline_mode = #tpu.pipeline_mode<synchronous>, transform_indices = @transform_4, window_bounds = array<i64: 8, 384>}, {pipeline_mode = #tpu.pipeline_mode<synchronous>, transform_indices = @transform_5, window_bounds = array<i64: 64, 128>}]} {
    %c0 = arith.constant 0 : index
    %c0_0 = arith.constant 0 : index
    %0 = vector.load %arg5[%c0, %c0_0] : memref<8x384xf32, #tpu.memory_space<vmem>>, vector<1x384xf32>
    %c1 = arith.constant 1 : index
    %c0_1 = arith.constant 0 : index
    %1 = vector.load %arg5[%c1, %c0_1] : memref<8x384xf32, #tpu.memory_space<vmem>>, vector<1x32xf32>
    %2 = vector.shape_cast %1 : vector<1x32xf32> to vector<1x32xf32>
    %3 = vector.broadcast %2 : vector<1x32xf32> to vector<8x32xf32>
    %c2 = arith.constant 2 : index
    %c0_2 = arith.constant 0 : index
    %4 = vector.load %arg5[%c2, %c0_2] : memref<8x384xf32, #tpu.memory_space<vmem>>, vector<1x32xf32>
    %c3 = arith.constant 3 : index
    %c0_3 = arith.constant 0 : index
    %5 = vector.load %arg5[%c3, %c0_3] : memref<8x384xf32, #tpu.memory_space<vmem>>, vector<1x32xf32>
    %c4 = arith.constant 4 : index
    %c0_4 = arith.constant 0 : index
    %6 = vector.load %arg5[%c4, %c0_4] : memref<8x384xf32, #tpu.memory_space<vmem>>, vector<1x128xf32>
    %c0_5 = arith.constant 0 : index
    %c0_6 = arith.constant 0 : index
    %7 = vector.load %arg1[%c0_5, %c0_6] : memref<64x16xf32, #tpu.memory_space<vmem>>, vector<64x16xf32>
    %c0_7 = arith.constant 0 : index
    %c0_8 = arith.constant 0 : index
    %8 = vector.load %arg2[%c0_7, %c0_8] : memref<16x384xf32, #tpu.memory_space<vmem>>, vector<16x384xf32>
    %cst = arith.constant dense<0.000000e+00> : vector<64x384xf32>
    %9 = tpu.matmul %7, %8, %cst {dimension_numbers = #tpu.dot_dimension_numbers<[1], [0], [0], [1], [0, 0, 1, 1], [], []>} : vector<64x16xf32>, vector<16x384xf32>, vector<64x384xf32> -> vector<64x384xf32>
    %10 = vector.broadcast %0 : vector<1x384xf32> to vector<64x384xf32>
    %11 = arith.addf %9, %10 : vector<64x384xf32>
    %c0_9 = arith.constant 0 : index
    %c0_10 = arith.constant 0 : index
    %12 = vector.load %arg7[%c0_9, %c0_10] : memref<64x384xf32, #tpu.memory_space<vmem>>, vector<64x384xf32>
    tpu.vector_store %arg7[%c0_9, %c0_10], %11 {strides = array<i32>} : memref<64x384xf32, #tpu.memory_space<vmem>>, vector<64x384xf32>,
    %c0_11 = arith.constant 0 : index
    %c0_12 = arith.constant 0 : index
    %13 = vector.load %arg3[%c0_11, %c0_12] : memref<32x384xf32, #tpu.memory_space<vmem>>, vector<32x384xf32>
    %cst_13 = arith.constant 0.000000e+00 : f32
    %14 = vector.broadcast %cst_13 : f32 to vector<8x32xf32>
    %c0_i32 = arith.constant 0 : i32
    %c8_i32 = arith.constant 8 : i32
    %15 = arith.muli %c0_i32, %c8_i32 : i32
    %16 = tpu.assume_multiple %15, 8 : i32
    %17 = arith.index_cast %16 : i32 to index
    %c0_14 = arith.constant 0 : index
    %18 = vector.load %arg7[%17, %c0_14] : memref<64x384xf32, #tpu.memory_space<vmem>>, vector<8x384xf32>
    %cst_15 = arith.constant dense<0.000000e+00> : vector<8x384xf32>
    %19 = tpu.matmul %14, %13, %cst_15 {dimension_numbers = #tpu.dot_dimension_numbers<[1], [0], [0], [1], [0, 0, 1, 1], [], []>} : vector<8x32xf32>, vector<32x384xf32>, vector<8x384xf32> -> vector<8x384xf32>
    %20 = vector.extract_strided_slice %18 {offsets = [0, 0], sizes = [8, 32], strides = [1, 1]} : vector<8x384xf32> to vector<8x32xf32>
    %21 = vector.extract_strided_slice %19 {offsets = [0, 0], sizes = [8, 32], strides = [1, 1]} : vector<8x384xf32> to vector<8x32xf32>
    %22 = arith.addf %20, %21 : vector<8x32xf32>
    %23 = arith.negf %22 : vector<8x32xf32>
    %24 = math.exp %23 : vector<8x32xf32>
    %cst_16 = arith.constant 1.000000e+00 : f32
    %25 = vector.broadcast %cst_16 : f32 to vector<8x32xf32>
    %26 = arith.addf %25, %24 : vector<8x32xf32>
    %27 = arith.divf %25, %26 : vector<8x32xf32>
    %28 = vector.extract_strided_slice %18 {offsets = [0, 128], sizes = [8, 32], strides = [1, 1]} : vector<8x384xf32> to vector<8x32xf32>
    %29 = vector.extract_strided_slice %19 {offsets = [0, 128], sizes = [8, 32], strides = [1, 1]} : vector<8x384xf32> to vector<8x32xf32>
    %30 = arith.addf %28, %29 : vector<8x32xf32>
    %31 = arith.negf %30 : vector<8x32xf32>
    %32 = math.exp %31 : vector<8x32xf32>
    %cst_17 = arith.constant 1.000000e+00 : f32
    %33 = vector.broadcast %cst_17 : f32 to vector<8x32xf32>
    %34 = arith.addf %33, %32 : vector<8x32xf32>
    %35 = arith.divf %33, %34 : vector<8x32xf32>
    %36 = vector.extract_strided_slice %18 {offsets = [0, 256], sizes = [8, 32], strides = [1, 1]} : vector<8x384xf32> to vector<8x32xf32>
    %37 = vector.extract_strided_slice %19 {offsets = [0, 256], sizes = [8, 32], strides = [1, 1]} : vector<8x384xf32> to vector<8x32xf32>
    %38 = arith.addf %37, %3 : vector<8x32xf32>
    %39 = arith.mulf %27, %38 : vector<8x32xf32>
    %40 = arith.addf %36, %39 : vector<8x32xf32>
    %41 = math.tanh %40 : vector<8x32xf32>
    %42 = arith.subf %14, %41 : vector<8x32xf32>
    %43 = arith.mulf %35, %42 : vector<8x32xf32>
    %44 = arith.addf %41, %43 : vector<8x32xf32>
    %45 = arith.index_cast %16 : i32 to index
    %c0_18 = arith.constant 0 : index
    %46 = vector.load %arg8[%45, %c0_18] : memref<64x32xf32, #tpu.memory_space<vmem>>, vector<8x32xf32>
    tpu.vector_store %arg8[%45, %c0_18], %44 {strides = array<i32>} : memref<64x32xf32, #tpu.memory_space<vmem>>, vector<8x32xf32>,
    %c1_i32 = arith.constant 1 : i32
    %c8_i32_19 = arith.constant 8 : i32
    %47 = arith.muli %c1_i32, %c8_i32_19 : i32
    %48 = tpu.assume_multiple %47, 8 : i32
    %49 = arith.index_cast %48 : i32 to index
    %c0_20 = arith.constant 0 : index
    %50 = vector.load %arg7[%49, %c0_20] : memref<64x384xf32, #tpu.memory_space<vmem>>, vector<8x384xf32>
    %cst_21 = arith.constant dense<0.000000e+00> : vector<8x384xf32>
    %51 = tpu.matmul %44, %13, %cst_21 {dimension_numbers = #tpu.dot_dimension_numbers<[1], [0], [0], [1], [0, 0, 1, 1], [], []>} : vector<8x32xf32>, vector<32x384xf32>, vector<8x384xf32> -> vector<8x384xf32>
    %52 = vector.extract_strided_slice %50 {offsets = [0, 0], sizes = [8, 32], strides = [1, 1]} : vector<8x384xf32> to vector<8x32xf32>
    %53 = vector.extract_strided_slice %51 {offsets = [0, 0], sizes = [8, 32], strides = [1, 1]} : vector<8x384xf32> to vector<8x32xf32>
    %54 = arith.addf %52, %53 : vector<8x32xf32>
    %55 = arith.negf %54 : vector<8x32xf32>
    %56 = math.exp %55 : vector<8x32xf32>
    %cst_22 = arith.constant 1.000000e+00 : f32
    %57 = vector.broadcast %cst_22 : f32 to vector<8x32xf32>
    %58 = arith.addf %57, %56 : vector<8x32xf32>
    %59 = arith.divf %57, %58 : vector<8x32xf32>
    %60 = vector.extract_strided_slice %50 {offsets = [0, 128], sizes = [8, 32], strides = [1, 1]} : vector<8x384xf32> to vector<8x32xf32>
    %61 = vector.extract_strided_slice %51 {offsets = [0, 128], sizes = [8, 32], strides = [1, 1]} : vector<8x384xf32> to vector<8x32xf32>
    %62 = arith.addf %60, %61 : vector<8x32xf32>
    %63 = arith.negf %62 : vector<8x32xf32>
    %64 = math.exp %63 : vector<8x32xf32>
    %cst_23 = arith.constant 1.000000e+00 : f32
    %65 = vector.broadcast %cst_23 : f32 to vector<8x32xf32>
    %66 = arith.addf %65, %64 : vector<8x32xf32>
    %67 = arith.divf %65, %66 : vector<8x32xf32>
    %68 = vector.extract_strided_slice %50 {offsets = [0, 256], sizes = [8, 32], strides = [1, 1]} : vector<8x384xf32> to vector<8x32xf32>
    %69 = vector.extract_strided_slice %51 {offsets = [0, 256], sizes = [8, 32], strides = [1, 1]} : vector<8x384xf32> to vector<8x32xf32>
    %70 = arith.addf %69, %3 : vector<8x32xf32>
    %71 = arith.mulf %59, %70 : vector<8x32xf32>
    %72 = arith.addf %68, %71 : vector<8x32xf32>
    %73 = math.tanh %72 : vector<8x32xf32>
    %74 = arith.subf %44, %73 : vector<8x32xf32>
    %75 = arith.mulf %67, %74 : vector<8x32xf32>
    %76 = arith.addf %73, %75 : vector<8x32xf32>
    %77 = arith.index_cast %48 : i32 to index
    %c0_24 = arith.constant 0 : index
    %78 = vector.load %arg8[%77, %c0_24] : memref<64x32xf32, #tpu.memory_space<vmem>>, vector<8x32xf32>
    tpu.vector_store %arg8[%77, %c0_24], %76 {strides = array<i32>} : memref<64x32xf32, #tpu.memory_space<vmem>>, vector<8x32xf32>,
    %c2_i32 = arith.constant 2 : i32
    %c8_i32_25 = arith.constant 8 : i32
    %79 = arith.muli %c2_i32, %c8_i32_25 : i32
    %80 = tpu.assume_multiple %79, 8 : i32
    %81 = arith.index_cast %80 : i32 to index
    %c0_26 = arith.constant 0 : index
    %82 = vector.load %arg7[%81, %c0_26] : memref<64x384xf32, #tpu.memory_space<vmem>>, vector<8x384xf32>
    %cst_27 = arith.constant dense<0.000000e+00> : vector<8x384xf32>
    %83 = tpu.matmul %76, %13, %cst_27 {dimension_numbers = #tpu.dot_dimension_numbers<[1], [0], [0], [1], [0, 0, 1, 1], [], []>} : vector<8x32xf32>, vector<32x384xf32>, vector<8x384xf32> -> vector<8x384xf32>
    %84 = vector.extract_strided_slice %82 {offsets = [0, 0], sizes = [8, 32], strides = [1, 1]} : vector<8x384xf32> to vector<8x32xf32>
    %85 = vector.extract_strided_slice %83 {offsets = [0, 0], sizes = [8, 32], strides = [1, 1]} : vector<8x384xf32> to vector<8x32xf32>
    %86 = arith.addf %84, %85 : vector<8x32xf32>
    %87 = arith.negf %86 : vector<8x32xf32>
    %88 = math.exp %87 : vector<8x32xf32>
    %cst_28 = arith.constant 1.000000e+00 : f32
    %89 = vector.broadcast %cst_28 : f32 to vector<8x32xf32>
    %90 = arith.addf %89, %88 : vector<8x32xf32>
    %91 = arith.divf %89, %90 : vector<8x32xf32>
    %92 = vector.extract_strided_slice %82 {offsets = [0, 128], sizes = [8, 32], strides = [1, 1]} : vector<8x384xf32> to vector<8x32xf32>
    %93 = vector.extract_strided_slice %83 {offsets = [0, 128], sizes = [8, 32], strides = [1, 1]} : vector<8x384xf32> to vector<8x32xf32>
    %94 = arith.addf %92, %93 : vector<8x32xf32>
    %95 = arith.negf %94 : vector<8x32xf32>
    %96 = math.exp %95 : vector<8x32xf32>
    %cst_29 = arith.constant 1.000000e+00 : f32
    %97 = vector.broadcast %cst_29 : f32 to vector<8x32xf32>
    %98 = arith.addf %97, %96 : vector<8x32xf32>
    %99 = arith.divf %97, %98 : vector<8x32xf32>
    %100 = vector.extract_strided_slice %82 {offsets = [0, 256], sizes = [8, 32], strides = [1, 1]} : vector<8x384xf32> to vector<8x32xf32>
    %101 = vector.extract_strided_slice %83 {offsets = [0, 256], sizes = [8, 32], strides = [1, 1]} : vector<8x384xf32> to vector<8x32xf32>
    %102 = arith.addf %101, %3 : vector<8x32xf32>
    %103 = arith.mulf %91, %102 : vector<8x32xf32>
    %104 = arith.addf %100, %103 : vector<8x32xf32>
    %105 = math.tanh %104 : vector<8x32xf32>
    %106 = arith.subf %76, %105 : vector<8x32xf32>
    %107 = arith.mulf %99, %106 : vector<8x32xf32>
    %108 = arith.addf %105, %107 : vector<8x32xf32>
    %109 = arith.index_cast %80 : i32 to index
    %c0_30 = arith.constant 0 : index
    %110 = vector.load %arg8[%109, %c0_30] : memref<64x32xf32, #tpu.memory_space<vmem>>, vector<8x32xf32>
    tpu.vector_store %arg8[%109, %c0_30], %108 {strides = array<i32>} : memref<64x32xf32, #tpu.memory_space<vmem>>, vector<8x32xf32>,
    %c3_i32 = arith.constant 3 : i32
    %c8_i32_31 = arith.constant 8 : i32
    %111 = arith.muli %c3_i32, %c8_i32_31 : i32
    %112 = tpu.assume_multiple %111, 8 : i32
    %113 = arith.index_cast %112 : i32 to index
    %c0_32 = arith.constant 0 : index
    %114 = vector.load %arg7[%113, %c0_32] : memref<64x384xf32, #tpu.memory_space<vmem>>, vector<8x384xf32>
    %cst_33 = arith.constant dense<0.000000e+00> : vector<8x384xf32>
    %115 = tpu.matmul %108, %13, %cst_33 {dimension_numbers = #tpu.dot_dimension_numbers<[1], [0], [0], [1], [0, 0, 1, 1], [], []>} : vector<8x32xf32>, vector<32x384xf32>, vector<8x384xf32> -> vector<8x384xf32>
    %116 = vector.extract_strided_slice %114 {offsets = [0, 0], sizes = [8, 32], strides = [1, 1]} : vector<8x384xf32> to vector<8x32xf32>
    %117 = vector.extract_strided_slice %115 {offsets = [0, 0], sizes = [8, 32], strides = [1, 1]} : vector<8x384xf32> to vector<8x32xf32>
    %118 = arith.addf %116, %117 : vector<8x32xf32>
    %119 = arith.negf %118 : vector<8x32xf32>
    %120 = math.exp %119 : vector<8x32xf32>
    %cst_34 = arith.constant 1.000000e+00 : f32
    %121 = vector.broadcast %cst_34 : f32 to vector<8x32xf32>
    %122 = arith.addf %121, %120 : vector<8x32xf32>
    %123 = arith.divf %121, %122 : vector<8x32xf32>
    %124 = vector.extract_strided_slice %114 {offsets = [0, 128], sizes = [8, 32], strides = [1, 1]} : vector<8x384xf32> to vector<8x32xf32>
    %125 = vector.extract_strided_slice %115 {offsets = [0, 128], sizes = [8, 32], strides = [1, 1]} : vector<8x384xf32> to vector<8x32xf32>
    %126 = arith.addf %124, %125 : vector<8x32xf32>
    %127 = arith.negf %126 : vector<8x32xf32>
    %128 = math.exp %127 : vector<8x32xf32>
    %cst_35 = arith.constant 1.000000e+00 : f32
    %129 = vector.broadcast %cst_35 : f32 to vector<8x32xf32>
    %130 = arith.addf %129, %128 : vector<8x32xf32>
    %131 = arith.divf %129, %130 : vector<8x32xf32>
    %132 = vector.extract_strided_slice %114 {offsets = [0, 256], sizes = [8, 32], strides = [1, 1]} : vector<8x384xf32> to vector<8x32xf32>
    %133 = vector.extract_strided_slice %115 {offsets = [0, 256], sizes = [8, 32], strides = [1, 1]} : vector<8x384xf32> to vector<8x32xf32>
    %134 = arith.addf %133, %3 : vector<8x32xf32>
    %135 = arith.mulf %123, %134 : vector<8x32xf32>
    %136 = arith.addf %132, %135 : vector<8x32xf32>
    %137 = math.tanh %136 : vector<8x32xf32>
    %138 = arith.subf %108, %137 : vector<8x32xf32>
    %139 = arith.mulf %131, %138 : vector<8x32xf32>
    %140 = arith.addf %137, %139 : vector<8x32xf32>
    %141 = arith.index_cast %112 : i32 to index
    %c0_36 = arith.constant 0 : index
    %142 = vector.load %arg8[%141, %c0_36] : memref<64x32xf32, #tpu.memory_space<vmem>>, vector<8x32xf32>
    tpu.vector_store %arg8[%141, %c0_36], %140 {strides = array<i32>} : memref<64x32xf32, #tpu.memory_space<vmem>>, vector<8x32xf32>,
    %c4_i32 = arith.constant 4 : i32
    %c8_i32_37 = arith.constant 8 : i32
    %143 = arith.muli %c4_i32, %c8_i32_37 : i32
    %144 = tpu.assume_multiple %143, 8 : i32
    %145 = arith.index_cast %144 : i32 to index
    %c0_38 = arith.constant 0 : index
    %146 = vector.load %arg7[%145, %c0_38] : memref<64x384xf32, #tpu.memory_space<vmem>>, vector<8x384xf32>
    %cst_39 = arith.constant dense<0.000000e+00> : vector<8x384xf32>
    %147 = tpu.matmul %140, %13, %cst_39 {dimension_numbers = #tpu.dot_dimension_numbers<[1], [0], [0], [1], [0, 0, 1, 1], [], []>} : vector<8x32xf32>, vector<32x384xf32>, vector<8x384xf32> -> vector<8x384xf32>
    %148 = vector.extract_strided_slice %146 {offsets = [0, 0], sizes = [8, 32], strides = [1, 1]} : vector<8x384xf32> to vector<8x32xf32>
    %149 = vector.extract_strided_slice %147 {offsets = [0, 0], sizes = [8, 32], strides = [1, 1]} : vector<8x384xf32> to vector<8x32xf32>
    %150 = arith.addf %148, %149 : vector<8x32xf32>
    %151 = arith.negf %150 : vector<8x32xf32>
    %152 = math.exp %151 : vector<8x32xf32>
    %cst_40 = arith.constant 1.000000e+00 : f32
    %153 = vector.broadcast %cst_40 : f32 to vector<8x32xf32>
    %154 = arith.addf %153, %152 : vector<8x32xf32>
    %155 = arith.divf %153, %154 : vector<8x32xf32>
    %156 = vector.extract_strided_slice %146 {offsets = [0, 128], sizes = [8, 32], strides = [1, 1]} : vector<8x384xf32> to vector<8x32xf32>
    %157 = vector.extract_strided_slice %147 {offsets = [0, 128], sizes = [8, 32], strides = [1, 1]} : vector<8x384xf32> to vector<8x32xf32>
    %158 = arith.addf %156, %157 : vector<8x32xf32>
    %159 = arith.negf %158 : vector<8x32xf32>
    %160 = math.exp %159 : vector<8x32xf32>
    %cst_41 = arith.constant 1.000000e+00 : f32
    %161 = vector.broadcast %cst_41 : f32 to vector<8x32xf32>
    %162 = arith.addf %161, %160 : vector<8x32xf32>
    %163 = arith.divf %161, %162 : vector<8x32xf32>
    %164 = vector.extract_strided_slice %146 {offsets = [0, 256], sizes = [8, 32], strides = [1, 1]} : vector<8x384xf32> to vector<8x32xf32>
    %165 = vector.extract_strided_slice %147 {offsets = [0, 256], sizes = [8, 32], strides = [1, 1]} : vector<8x384xf32> to vector<8x32xf32>
    %166 = arith.addf %165, %3 : vector<8x32xf32>
    %167 = arith.mulf %155, %166 : vector<8x32xf32>
    %168 = arith.addf %164, %167 : vector<8x32xf32>
    %169 = math.tanh %168 : vector<8x32xf32>
    %170 = arith.subf %140, %169 : vector<8x32xf32>
    %171 = arith.mulf %163, %170 : vector<8x32xf32>
    %172 = arith.addf %169, %171 : vector<8x32xf32>
    %173 = arith.index_cast %144 : i32 to index
    %c0_42 = arith.constant 0 : index
    %174 = vector.load %arg8[%173, %c0_42] : memref<64x32xf32, #tpu.memory_space<vmem>>, vector<8x32xf32>
    tpu.vector_store %arg8[%173, %c0_42], %172 {strides = array<i32>} : memref<64x32xf32, #tpu.memory_space<vmem>>, vector<8x32xf32>,
    %c5_i32 = arith.constant 5 : i32
    %c8_i32_43 = arith.constant 8 : i32
    %175 = arith.muli %c5_i32, %c8_i32_43 : i32
    %176 = tpu.assume_multiple %175, 8 : i32
    %177 = arith.index_cast %176 : i32 to index
    %c0_44 = arith.constant 0 : index
    %178 = vector.load %arg7[%177, %c0_44] : memref<64x384xf32, #tpu.memory_space<vmem>>, vector<8x384xf32>
    %cst_45 = arith.constant dense<0.000000e+00> : vector<8x384xf32>
    %179 = tpu.matmul %172, %13, %cst_45 {dimension_numbers = #tpu.dot_dimension_numbers<[1], [0], [0], [1], [0, 0, 1, 1], [], []>} : vector<8x32xf32>, vector<32x384xf32>, vector<8x384xf32> -> vector<8x384xf32>
    %180 = vector.extract_strided_slice %178 {offsets = [0, 0], sizes = [8, 32], strides = [1, 1]} : vector<8x384xf32> to vector<8x32xf32>
    %181 = vector.extract_strided_slice %179 {offsets = [0, 0], sizes = [8, 32], strides = [1, 1]} : vector<8x384xf32> to vector<8x32xf32>
    %182 = arith.addf %180, %181 : vector<8x32xf32>
    %183 = arith.negf %182 : vector<8x32xf32>
    %184 = math.exp %183 : vector<8x32xf32>
    %cst_46 = arith.constant 1.000000e+00 : f32
    %185 = vector.broadcast %cst_46 : f32 to vector<8x32xf32>
    %186 = arith.addf %185, %184 : vector<8x32xf32>
    %187 = arith.divf %185, %186 : vector<8x32xf32>
    %188 = vector.extract_strided_slice %178 {offsets = [0, 128], sizes = [8, 32], strides = [1, 1]} : vector<8x384xf32> to vector<8x32xf32>
    %189 = vector.extract_strided_slice %179 {offsets = [0, 128], sizes = [8, 32], strides = [1, 1]} : vector<8x384xf32> to vector<8x32xf32>
    %190 = arith.addf %188, %189 : vector<8x32xf32>
    %191 = arith.negf %190 : vector<8x32xf32>
    %192 = math.exp %191 : vector<8x32xf32>
    %cst_47 = arith.constant 1.000000e+00 : f32
    %193 = vector.broadcast %cst_47 : f32 to vector<8x32xf32>
    %194 = arith.addf %193, %192 : vector<8x32xf32>
    %195 = arith.divf %193, %194 : vector<8x32xf32>
    %196 = vector.extract_strided_slice %178 {offsets = [0, 256], sizes = [8, 32], strides = [1, 1]} : vector<8x384xf32> to vector<8x32xf32>
    %197 = vector.extract_strided_slice %179 {offsets = [0, 256], sizes = [8, 32], strides = [1, 1]} : vector<8x384xf32> to vector<8x32xf32>
    %198 = arith.addf %197, %3 : vector<8x32xf32>
    %199 = arith.mulf %187, %198 : vector<8x32xf32>
    %200 = arith.addf %196, %199 : vector<8x32xf32>
    %201 = math.tanh %200 : vector<8x32xf32>
    %202 = arith.subf %172, %201 : vector<8x32xf32>
    %203 = arith.mulf %195, %202 : vector<8x32xf32>
    %204 = arith.addf %201, %203 : vector<8x32xf32>
    %205 = arith.index_cast %176 : i32 to index
    %c0_48 = arith.constant 0 : index
    %206 = vector.load %arg8[%205, %c0_48] : memref<64x32xf32, #tpu.memory_space<vmem>>, vector<8x32xf32>
    tpu.vector_store %arg8[%205, %c0_48], %204 {strides = array<i32>} : memref<64x32xf32, #tpu.memory_space<vmem>>, vector<8x32xf32>,
    %c6_i32 = arith.constant 6 : i32
    %c8_i32_49 = arith.constant 8 : i32
    %207 = arith.muli %c6_i32, %c8_i32_49 : i32
    %208 = tpu.assume_multiple %207, 8 : i32
    %209 = arith.index_cast %208 : i32 to index
    %c0_50 = arith.constant 0 : index
    %210 = vector.load %arg7[%209, %c0_50] : memref<64x384xf32, #tpu.memory_space<vmem>>, vector<8x384xf32>
    %cst_51 = arith.constant dense<0.000000e+00> : vector<8x384xf32>
    %211 = tpu.matmul %204, %13, %cst_51 {dimension_numbers = #tpu.dot_dimension_numbers<[1], [0], [0], [1], [0, 0, 1, 1], [], []>} : vector<8x32xf32>, vector<32x384xf32>, vector<8x384xf32> -> vector<8x384xf32>
    %212 = vector.extract_strided_slice %210 {offsets = [0, 0], sizes = [8, 32], strides = [1, 1]} : vector<8x384xf32> to vector<8x32xf32>
    %213 = vector.extract_strided_slice %211 {offsets = [0, 0], sizes = [8, 32], strides = [1, 1]} : vector<8x384xf32> to vector<8x32xf32>
    %214 = arith.addf %212, %213 : vector<8x32xf32>
    %215 = arith.negf %214 : vector<8x32xf32>
    %216 = math.exp %215 : vector<8x32xf32>
    %cst_52 = arith.constant 1.000000e+00 : f32
    %217 = vector.broadcast %cst_52 : f32 to vector<8x32xf32>
    %218 = arith.addf %217, %216 : vector<8x32xf32>
    %219 = arith.divf %217, %218 : vector<8x32xf32>
    %220 = vector.extract_strided_slice %210 {offsets = [0, 128], sizes = [8, 32], strides = [1, 1]} : vector<8x384xf32> to vector<8x32xf32>
    %221 = vector.extract_strided_slice %211 {offsets = [0, 128], sizes = [8, 32], strides = [1, 1]} : vector<8x384xf32> to vector<8x32xf32>
    %222 = arith.addf %220, %221 : vector<8x32xf32>
    %223 = arith.negf %222 : vector<8x32xf32>
    %224 = math.exp %223 : vector<8x32xf32>
    %cst_53 = arith.constant 1.000000e+00 : f32
    %225 = vector.broadcast %cst_53 : f32 to vector<8x32xf32>
    %226 = arith.addf %225, %224 : vector<8x32xf32>
    %227 = arith.divf %225, %226 : vector<8x32xf32>
    %228 = vector.extract_strided_slice %210 {offsets = [0, 256], sizes = [8, 32], strides = [1, 1]} : vector<8x384xf32> to vector<8x32xf32>
    %229 = vector.extract_strided_slice %211 {offsets = [0, 256], sizes = [8, 32], strides = [1, 1]} : vector<8x384xf32> to vector<8x32xf32>
    %230 = arith.addf %229, %3 : vector<8x32xf32>
    %231 = arith.mulf %219, %230 : vector<8x32xf32>
    %232 = arith.addf %228, %231 : vector<8x32xf32>
    %233 = math.tanh %232 : vector<8x32xf32>
    %234 = arith.subf %204, %233 : vector<8x32xf32>
    %235 = arith.mulf %227, %234 : vector<8x32xf32>
    %236 = arith.addf %233, %235 : vector<8x32xf32>
    %237 = arith.index_cast %208 : i32 to index
    %c0_54 = arith.constant 0 : index
    %238 = vector.load %arg8[%237, %c0_54] : memref<64x32xf32, #tpu.memory_space<vmem>>, vector<8x32xf32>
    tpu.vector_store %arg8[%237, %c0_54], %236 {strides = array<i32>} : memref<64x32xf32, #tpu.memory_space<vmem>>, vector<8x32xf32>,
    %c7_i32 = arith.constant 7 : i32
    %c8_i32_55 = arith.constant 8 : i32
    %239 = arith.muli %c7_i32, %c8_i32_55 : i32
    %240 = tpu.assume_multiple %239, 8 : i32
    %241 = arith.index_cast %240 : i32 to index
    %c0_56 = arith.constant 0 : index
    %242 = vector.load %arg7[%241, %c0_56] : memref<64x384xf32, #tpu.memory_space<vmem>>, vector<8x384xf32>
    %cst_57 = arith.constant dense<0.000000e+00> : vector<8x384xf32>
    %243 = tpu.matmul %236, %13, %cst_57 {dimension_numbers = #tpu.dot_dimension_numbers<[1], [0], [0], [1], [0, 0, 1, 1], [], []>} : vector<8x32xf32>, vector<32x384xf32>, vector<8x384xf32> -> vector<8x384xf32>
    %244 = vector.extract_strided_slice %242 {offsets = [0, 0], sizes = [8, 32], strides = [1, 1]} : vector<8x384xf32> to vector<8x32xf32>
    %245 = vector.extract_strided_slice %243 {offsets = [0, 0], sizes = [8, 32], strides = [1, 1]} : vector<8x384xf32> to vector<8x32xf32>
    %246 = arith.addf %244, %245 : vector<8x32xf32>
    %247 = arith.negf %246 : vector<8x32xf32>
    %248 = math.exp %247 : vector<8x32xf32>
    %cst_58 = arith.constant 1.000000e+00 : f32
    %249 = vector.broadcast %cst_58 : f32 to vector<8x32xf32>
    %250 = arith.addf %249, %248 : vector<8x32xf32>
    %251 = arith.divf %249, %250 : vector<8x32xf32>
    %252 = vector.extract_strided_slice %242 {offsets = [0, 128], sizes = [8, 32], strides = [1, 1]} : vector<8x384xf32> to vector<8x32xf32>
    %253 = vector.extract_strided_slice %243 {offsets = [0, 128], sizes = [8, 32], strides = [1, 1]} : vector<8x384xf32> to vector<8x32xf32>
    %254 = arith.addf %252, %253 : vector<8x32xf32>
    %255 = arith.negf %254 : vector<8x32xf32>
    %256 = math.exp %255 : vector<8x32xf32>
    %cst_59 = arith.constant 1.000000e+00 : f32
    %257 = vector.broadcast %cst_59 : f32 to vector<8x32xf32>
    %258 = arith.addf %257, %256 : vector<8x32xf32>
    %259 = arith.divf %257, %258 : vector<8x32xf32>
    %260 = vector.extract_strided_slice %242 {offsets = [0, 256], sizes = [8, 32], strides = [1, 1]} : vector<8x384xf32> to vector<8x32xf32>
    %261 = vector.extract_strided_slice %243 {offsets = [0, 256], sizes = [8, 32], strides = [1, 1]} : vector<8x384xf32> to vector<8x32xf32>
    %262 = arith.addf %261, %3 : vector<8x32xf32>
    %263 = arith.mulf %251, %262 : vector<8x32xf32>
    %264 = arith.addf %260, %263 : vector<8x32xf32>
    %265 = math.tanh %264 : vector<8x32xf32>
    %266 = arith.subf %236, %265 : vector<8x32xf32>
    %267 = arith.mulf %259, %266 : vector<8x32xf32>
    %268 = arith.addf %265, %267 : vector<8x32xf32>
    %269 = arith.index_cast %240 : i32 to index
    %c0_60 = arith.constant 0 : index
    %270 = vector.load %arg8[%269, %c0_60] : memref<64x32xf32, #tpu.memory_space<vmem>>, vector<8x32xf32>
    tpu.vector_store %arg8[%269, %c0_60], %268 {strides = array<i32>} : memref<64x32xf32, #tpu.memory_space<vmem>>, vector<8x32xf32>,
    %c8_i32_61 = arith.constant 8 : i32
    %c0_62 = arith.constant 0 : index
    %c0_63 = arith.constant 0 : index
    %271 = vector.load %arg8[%c0_62, %c0_63] : memref<64x32xf32, #tpu.memory_space<vmem>>, vector<64x32xf32>
    %cst_64 = arith.constant dense<0.000000e+00> : vector<64xf32>
    %272 = vector.multi_reduction <add>, %271, %cst_64 [1] : vector<64x32xf32> to vector<64xf32>
    %273 = vector.shape_cast %272 : vector<64xf32> to vector<64x1xf32>
    %cst_65 = arith.constant 3.200000e+01 : f32
    %274 = vector.broadcast %cst_65 : f32 to vector<64x1xf32>
    %275 = arith.divf %273, %274 : vector<64x1xf32>
    %276 = vector.broadcast %275 : vector<64x1xf32> to vector<64x32xf32>
    %277 = arith.subf %271, %276 : vector<64x32xf32>
    %278 = arith.mulf %277, %277 : vector<64x32xf32>
    %cst_66 = arith.constant dense<0.000000e+00> : vector<64xf32>
    %279 = vector.multi_reduction <add>, %278, %cst_66 [1] : vector<64x32xf32> to vector<64xf32>
    %280 = vector.shape_cast %279 : vector<64xf32> to vector<64x1xf32>
    %cst_67 = arith.constant 3.200000e+01 : f32
    %281 = vector.broadcast %cst_67 : f32 to vector<64x1xf32>
    %282 = arith.divf %280, %281 : vector<64x1xf32>
    %283 = vector.broadcast %275 : vector<64x1xf32> to vector<64x32xf32>
    %284 = arith.subf %271, %283 : vector<64x32xf32>
    %cst_68 = arith.constant 9.99999974E-6 : f32
    %285 = vector.broadcast %cst_68 : f32 to vector<64x1xf32>
    %286 = arith.addf %282, %285 : vector<64x1xf32>
    %287 = math.rsqrt %286 : vector<64x1xf32>
    %288 = vector.broadcast %287 : vector<64x1xf32> to vector<64x32xf32>
    %289 = arith.mulf %284, %288 : vector<64x32xf32>
    %290 = vector.broadcast %4 : vector<1x32xf32> to vector<64x32xf32>
    %291 = arith.mulf %289, %290 : vector<64x32xf32>
    %292 = vector.broadcast %5 : vector<1x32xf32> to vector<64x32xf32>
    %293 = arith.addf %291, %292 : vector<64x32xf32>
    %c0_69 = arith.constant 0 : index
    %c0_70 = arith.constant 0 : index
    %294 = vector.load %arg4[%c0_69, %c0_70] : memref<32x128xf32, #tpu.memory_space<vmem>>, vector<32x128xf32>
    %cst_71 = arith.constant dense<0.000000e+00> : vector<64x128xf32>
    %295 = tpu.matmul %293, %294, %cst_71 {dimension_numbers = #tpu.dot_dimension_numbers<[1], [0], [0], [1], [0, 0, 1, 1], [], []>} : vector<64x32xf32>, vector<32x128xf32>, vector<64x128xf32> -> vector<64x128xf32>
    %296 = vector.broadcast %6 : vector<1x128xf32> to vector<64x128xf32>
    %297 = arith.addf %295, %296 : vector<64x128xf32>
    %298 = arith.negf %297 : vector<64x128xf32>
    %299 = math.exp %298 : vector<64x128xf32>
    %cst_72 = arith.constant 1.000000e+00 : f32
    %300 = vector.broadcast %cst_72 : f32 to vector<64x128xf32>
    %301 = arith.addf %300, %299 : vector<64x128xf32>
    %302 = arith.divf %300, %301 : vector<64x128xf32>
    %c0_73 = arith.constant 0 : index
    %c0_74 = arith.constant 0 : index
    %303 = vector.load %arg6[%c0_73, %c0_74] : memref<64x128xf32, #tpu.memory_space<vmem>>, vector<64x128xf32>
    tpu.vector_store %arg6[%c0_73, %c0_74], %302 {strides = array<i32>} : memref<64x128xf32, #tpu.memory_space<vmem>>, vector<64x128xf32>,
    return
  }
  func.func @transform_0(%arg0: i32) -> (i32, i32) {
    %c0_i32 = arith.constant 0 : i32
    %c0_i32_0 = arith.constant 0 : i32
    %c0_i32_1 = arith.constant 0 : i32
    return %c0_i32, %c0_i32_0 : i32, i32
  }
  func.func @transform_1(%arg0: i32) -> (i32, i32) {
    %c0_i32 = arith.constant 0 : i32
    %c0_i32_0 = arith.constant 0 : i32
    %c0_i32_1 = arith.constant 0 : i32
    return %c0_i32, %c0_i32_0 : i32, i32
  }
  func.func @transform_2(%arg0: i32) -> (i32, i32) {
    %c0_i32 = arith.constant 0 : i32
    %c0_i32_0 = arith.constant 0 : i32
    %c0_i32_1 = arith.constant 0 : i32
    return %c0_i32, %c0_i32_0 : i32, i32
  }
  func.func @transform_3(%arg0: i32) -> (i32, i32) {
    %c0_i32 = arith.constant 0 : i32
    %c0_i32_0 = arith.constant 0 : i32
    %c0_i32_1 = arith.constant 0 : i32
    return %c0_i32, %c0_i32_0 : i32, i32
  }
  func.func @transform_4(%arg0: i32) -> (i32, i32) {
    %c0_i32 = arith.constant 0 : i32
    %c0_i32_0 = arith.constant 0 : i32
    %c0_i32_1 = arith.constant 0 : i32
    return %c0_i32, %c0_i32_0 : i32, i32
  }
  func.func @transform_5(%arg0: i32) -> (i32, i32) {
    %c0_i32 = arith.constant 0 : i32
    %c0_i32_0 = arith.constant 0 : i32
    %c0_i32_1 = arith.constant 0 : i32
    return %c0_i32, %c0_i32_0 : i32, i32
  }
}

</mosaic_0001>

<llo_original>
// kernel: gru_model_forward.1
$region0: #{gru_model_forward.1}
  #allocation0 [shape = 'u32[]', space=smem, size = 0x4, offset = 0x4, fixed_abs, tag = 'smem constant byte address 0x4 - core index']
  #allocation1 [shape = 'u32[72,128]{1,0:T(1,128)}', space=vmem, size = 0x9000, scoped, tag = 'internal scratch']
  #allocation2 [shape = 'f32[64,384]{1,0:T(8,128)}', space=vmem, size = 0x18000, scoped, tag = 'scratch operand']
  #allocation3 [shape = 'f32[64,32]{1,0:T(8,128)}', space=vmem, size = 0x8000, scoped, tag = 'scratch operand']
  %s0 = inlined_call_operand.vmem [shape: f32[64,16], index: 0, kind: input, shape index: {}]
  %s1 = inlined_call_operand.vmem [shape: f32[16,384], index: 1, kind: input, shape index: {}]
  %s2 = inlined_call_operand.vmem [shape: f32[32,384], index: 2, kind: input, shape index: {}]
  %s3 = inlined_call_operand.vmem [shape: f32[32,128], index: 3, kind: input, shape index: {}]
  %s4 = inlined_call_operand.vmem [shape: f32[8,384], index: 4, kind: input, shape index: {}]
  %s5 = inlined_call_operand.vmem [shape: f32[64,128], index: 5, kind: output, shape index: {}]
  %s6 = sld [smem:[#allocation0]]
  $region30: #{gru_model_forward.1} parent=0
    _
  %s8 = ssub.s32 1, %s6
  %s9 = scalar_select 0, %s8, %s6
  // Predicated region
  $region2: #{gru_model_forward.1} parent=0 // pred_check
    _
  $region3: #{gru_model_forward.1} parent=0 // pred_check_branch
    %11 = sbr.rel (0) target = $region5
  $region4: #{gru_model_forward.1} parent=0 // pred_region
    _
  $region5: #{gru_model_forward.1} parent=0 // pred_fallthru
    _
  // Predicated region
  $region6: #{gru_model_forward.1} parent=0 // pred_check
    _
  $region7: #{gru_model_forward.1} parent=0 // pred_check_branch
    %13 = sbr.rel (0) target = $region9
  $region8: #{gru_model_forward.1} parent=0 // pred_region
    _
  $region9: #{gru_model_forward.1} parent=0 // pred_fallthru
    _
  // Predicated region
  $region10: #{gru_model_forward.1} parent=0 // pred_check
    _
  $region11: #{gru_model_forward.1} parent=0 // pred_check_branch
    %15 = sbr.rel (0) target = $region13
  $region12: #{gru_model_forward.1} parent=0 // pred_region
    _
  $region13: #{gru_model_forward.1} parent=0 // pred_fallthru
    _
  // Predicated region
  $region14: #{gru_model_forward.1} parent=0 // pred_check
    _
  $region15: #{gru_model_forward.1} parent=0 // pred_check_branch
    %17 = sbr.rel (0) target = $region17
  $region16: #{gru_model_forward.1} parent=0 // pred_region
    _
  $region17: #{gru_model_forward.1} parent=0 // pred_fallthru
    _
  // Predicated region
  $region18: #{gru_model_forward.1} parent=0 // pred_check
    _
  $region19: #{gru_model_forward.1} parent=0 // pred_check_branch
    %19 = sbr.rel (0) target = $region21
  $region20: #{gru_model_forward.1} parent=0 // pred_region
    _
  $region21: #{gru_model_forward.1} parent=0 // pred_fallthru
    _
  %v20 = vld [vmem:[%s4] ss:$8 sm:$0x7]
  %v21 = vld [vmem:[%s4 + $0x1] ss:$0 sm:$0xff]
  %v22 = vld [vmem:[%s4 + $0x2] ss:$0 sm:$0xff]
  %v23 = vld [vmem:[%s4 + $0x3] ss:$0 sm:$0xff]
  %v24 = vld [vmem:[%s4 + $0x4] ss:$0 sm:$0xff]
  %v25 = vld [vmem:[%s0] sm:$0xff]
  %v26 = vld [vmem:[%s0 + $0x8] sm:$0xff]
  %v27 = vld [vmem:[%s0 + $0x10] sm:$0xff]
  %v28 = vld [vmem:[%s0 + $0x18] sm:$0xff]
  %v29 = vld [vmem:[%s0 + $0x20] sm:$0xff]
  %v30 = vld [vmem:[%s0 + $0x28] sm:$0xff]
  %v31 = vld [vmem:[%s0 + $0x30] sm:$0xff]
  %v32 = vld [vmem:[%s0 + $0x38] sm:$0xff]
  %v33 = vld [vmem:[%s1] sm:$0xff]
  %v34 = vld [vmem:[%s1 + $0x8] sm:$0xff]
  %v35 = vld [vmem:[%s1 + $0x10] sm:$0xff]
  %v36 = vld [vmem:[%s1 + $0x18] sm:$0xff]
  %v37 = vld [vmem:[%s1 + $0x20] sm:$0xff]
  %v38 = vld [vmem:[%s1 + $0x28] sm:$0xff]
  %v40 = vperm.slane %v20, 0
  %v41 = vperm.slane %v20, 1
  %v42 = vperm.slane %v20, 2
  %vm46 = vcmask 130048
  %v48 = vsel %vm46, %v25, 0
  %v51 = vsel %vm46, %v26, 0
  %v54 = vsel %vm46, %v27, 0
  %v57 = vsel %vm46, %v28, 0
  %v60 = vsel %vm46, %v29, 0
  %v63 = vsel %vm46, %v30, 0
  %v66 = vsel %vm46, %v31, 0
  %v69 = vsel %vm46, %v32, 0
  %71 = vmatpush.msra.mxu0 0.0
  %72 = vmatpush.msra.mxu0 0.0
  %73 = vmatpush.msra.mxu0 0.0
  %74 = vmatpush.msra.mxu0 0.0
  %75 = vmatpush.msra.mxu0 0.0
  %76 = vmatpush.msra.mxu0 0.0
  %77 = vmatpush.msra.mxu0 0.0
  %78 = vmatpush.msra.mxu0 0.0
  %79 = vmatpush.msra.mxu0 0.0
  %80 = vmatpush.msra.mxu0 0.0
  %81 = vmatpush.msra.mxu0 0.0
  %82 = vmatpush.msra.mxu0 0.0
  %83 = vmatpush.msra.mxu0 0.0
  %84 = vmatpush.msra.mxu0 0.0
  %85 = vmatpush.msra.mxu0 %v36
  %86 = vmatpush.msra.mxu0 %v33
  %87 = vmatmul.f32.gmra.mxu0 %v48
  %v88 = vpop.f32.mrf.mxu0
  %v89 = vadd.f32 %v40, %v88
  %90 = vmatmul.f32.gmra.mxu0 %v51
  %v91 = vpop.f32.mrf.mxu0
  %v92 = vadd.f32 %v40, %v91
  %93 = vmatmul.f32.gmra.mxu0 %v54
  %v94 = vpop.f32.mrf.mxu0
  %v95 = vadd.f32 %v40, %v94
  %96 = vmatmul.f32.gmra.mxu0 %v57
  %v97 = vpop.f32.mrf.mxu0
  %v98 = vadd.f32 %v40, %v97
  %99 = vmatmul.f32.gmra.mxu0 %v60
  %v100 = vpop.f32.mrf.mxu0
  %v101 = vadd.f32 %v40, %v100
  %102 = vmatmul.f32.gmra.mxu0 %v63
  %v103 = vpop.f32.mrf.mxu0
  %v104 = vadd.f32 %v40, %v103
  %105 = vmatmul.f32.gmra.mxu0 %v66
  %v106 = vpop.f32.mrf.mxu0
  %v107 = vadd.f32 %v40, %v106
  %108 = vmatmul.f32.gmra.mxu0 %v69
  %v109 = vpop.f32.mrf.mxu0
  %v110 = vadd.f32 %v40, %v109
  %111 = vdwg.mxu0
  %112 = vmatpush.msra.mxu0 0.0
  %113 = vmatpush.msra.mxu0 0.0
  %114 = vmatpush.msra.mxu0 0.0
  %115 = vmatpush.msra.mxu0 0.0
  %116 = vmatpush.msra.mxu0 0.0
  %117 = vmatpush.msra.mxu0 0.0
  %118 = vmatpush.msra.mxu0 0.0
  %119 = vmatpush.msra.mxu0 0.0
  %120 = vmatpush.msra.mxu0 0.0
  %121 = vmatpush.msra.mxu0 0.0
  %122 = vmatpush.msra.mxu0 0.0
  %123 = vmatpush.msra.mxu0 0.0
  %124 = vmatpush.msra.mxu0 0.0
  %125 = vmatpush.msra.mxu0 0.0
  %126 = vmatpush.msra.mxu0 %v37
  %127 = vmatpush.msra.mxu0 %v34
  %128 = vmatmul.f32.gmra.mxu0 %v48
  %v129 = vpop.f32.mrf.mxu0
  %v130 = vadd.f32 %v41, %v129
  %131 = vmatmul.f32.gmra.mxu0 %v51
  %v132 = vpop.f32.mrf.mxu0
  %v133 = vadd.f32 %v41, %v132
  %134 = vmatmul.f32.gmra.mxu0 %v54
  %v135 = vpop.f32.mrf.mxu0
  %v136 = vadd.f32 %v41, %v135
  %137 = vmatmul.f32.gmra.mxu0 %v57
  %v138 = vpop.f32.mrf.mxu0
  %v139 = vadd.f32 %v41, %v138
  %140 = vmatmul.f32.gmra.mxu0 %v60
  %v141 = vpop.f32.mrf.mxu0
  %v142 = vadd.f32 %v41, %v141
  %143 = vmatmul.f32.gmra.mxu0 %v63
  %v144 = vpop.f32.mrf.mxu0
  %v145 = vadd.f32 %v41, %v144
  %146 = vmatmul.f32.gmra.mxu0 %v66
  %v147 = vpop.f32.mrf.mxu0
  %v148 = vadd.f32 %v41, %v147
  %149 = vmatmul.f32.gmra.mxu0 %v69
  %v150 = vpop.f32.mrf.mxu0
  %v151 = vadd.f32 %v41, %v150
  %152 = vdwg.mxu0
  %153 = vmatpush.msra.mxu0 0.0
  %154 = vmatpush.msra.mxu0 0.0
  %155 = vmatpush.msra.mxu0 0.0
  %156 = vmatpush.msra.mxu0 0.0
  %157 = vmatpush.msra.mxu0 0.0
  %158 = vmatpush.msra.mxu0 0.0
  %159 = vmatpush.msra.mxu0 0.0
  %160 = vmatpush.msra.mxu0 0.0
  %161 = vmatpush.msra.mxu0 0.0
  %162 = vmatpush.msra.mxu0 0.0
  %163 = vmatpush.msra.mxu0 0.0
  %164 = vmatpush.msra.mxu0 0.0
  %165 = vmatpush.msra.mxu0 0.0
  %166 = vmatpush.msra.mxu0 0.0
  %167 = vmatpush.msra.mxu0 %v38
  %168 = vmatpush.msra.mxu0 %v35
  %169 = vmatmul.f32.gmra.mxu0 %v48
  %v170 = vpop.f32.mrf.mxu0
  %v171 = vadd.f32 %v42, %v170
  %172 = vmatmul.f32.gmra.mxu0 %v51
  %v173 = vpop.f32.mrf.mxu0
  %v174 = vadd.f32 %v42, %v173
  %175 = vmatmul.f32.gmra.mxu0 %v54
  %v176 = vpop.f32.mrf.mxu0
  %v177 = vadd.f32 %v42, %v176
  %178 = vmatmul.f32.gmra.mxu0 %v57
  %v179 = vpop.f32.mrf.mxu0
  %v180 = vadd.f32 %v42, %v179
  %181 = vmatmul.f32.gmra.mxu0 %v60
  %v182 = vpop.f32.mrf.mxu0
  %v183 = vadd.f32 %v42, %v182
  %184 = vmatmul.f32.gmra.mxu0 %v63
  %v185 = vpop.f32.mrf.mxu0
  %v186 = vadd.f32 %v42, %v185
  %187 = vmatmul.f32.gmra.mxu0 %v66
  %v188 = vpop.f32.mrf.mxu0
  %v189 = vadd.f32 %v42, %v188
  %190 = vmatmul.f32.gmra.mxu0 %v69
  %v191 = vpop.f32.mrf.mxu0
  %v192 = vadd.f32 %v42, %v191
  %193 = vdwg.mxu0
  %194 = vst [vmem:[#allocation2] sm:$0xff] %v89
  %195 = vst [vmem:[#allocation2 + $0x8] sm:$0xff] %v130
  %196 = vst [vmem:[#allocation2 + $0x10] sm:$0xff] %v171
  %197 = vst [vmem:[#allocation2 + $0x18] sm:$0xff] %v92
  %198 = vst [vmem:[#allocation2 + $0x20] sm:$0xff] %v133
  %199 = vst [vmem:[#allocation2 + $0x28] sm:$0xff] %v174
  %200 = vst [vmem:[#allocation2 + $0x30] sm:$0xff] %v95
  %201 = vst [vmem:[#allocation2 + $0x38] sm:$0xff] %v136
  %202 = vst [vmem:[#allocation2 + $0x40] sm:$0xff] %v177
  %203 = vst [vmem:[#allocation2 + $0x48] sm:$0xff] %v98
  %204 = vst [vmem:[#allocation2 + $0x50] sm:$0xff] %v139
  %205 = vst [vmem:[#allocation2 + $0x58] sm:$0xff] %v180
  %206 = vst [vmem:[#allocation2 + $0x60] sm:$0xff] %v101
  %207 = vst [vmem:[#allocation2 + $0x68] sm:$0xff] %v142
  %208 = vst [vmem:[#allocation2 + $0x70] sm:$0xff] %v183
  %209 = vst [vmem:[#allocation2 + $0x78] sm:$0xff] %v104
  %210 = vst [vmem:[#allocation2 + $0x80] sm:$0xff] %v145
  %211 = vst [vmem:[#allocation2 + $0x88] sm:$0xff] %v186
  %212 = vst [vmem:[#allocation2 + $0x90] sm:$0xff] %v107
  %213 = vst [vmem:[#allocation2 + $0x98] sm:$0xff] %v148
  %214 = vst [vmem:[#allocation2 + $0xa0] sm:$0xff] %v189
  %215 = vst [vmem:[#allocation2 + $0xa8] sm:$0xff] %v110
  %216 = vst [vmem:[#allocation2 + $0xb0] sm:$0xff] %v151
  %217 = vst [vmem:[#allocation2 + $0xb8] sm:$0xff] %v192
  %v218 = vld [vmem:[%s2] sm:$0xff]
  %v219 = vld [vmem:[%s2 + $0x8] sm:$0xff]
  %v220 = vld [vmem:[%s2 + $0x10] sm:$0xff]
  %v221 = vld [vmem:[%s2 + $0x18] sm:$0xff]
  %v222 = vld [vmem:[%s2 + $0x20] sm:$0xff]
  %v223 = vld [vmem:[%s2 + $0x28] sm:$0xff]
  %v224 = vld [vmem:[%s2 + $0x30] sm:$0xff]
  %v225 = vld [vmem:[%s2 + $0x38] sm:$0xff]
  %v226 = vld [vmem:[%s2 + $0x40] sm:$0xff]
  %v227 = vld [vmem:[%s2 + $0x48] sm:$0xff]
  %v228 = vld [vmem:[%s2 + $0x50] sm:$0xff]
  %v229 = vld [vmem:[%s2 + $0x58] sm:$0xff]
  %s230 = smul.u32 0, 3
  %s231 = smul.addr %s230, 8
  %s232 = scalar_lea.vmem [#allocation2], %s231
  %v233 = vld [vmem:[%s232] sm:$0xff]
  %v234 = vld [vmem:[%s232 + $0x8] sm:$0xff]
  %v235 = vld [vmem:[%s232 + $0x10] sm:$0xff]
  %vm236 = vcmask 261120
  %v238 = vsel %vm236, 0.0, 0
  %240 = vmatpush.msra.mxu0 0.0
  %241 = vmatpush.msra.mxu0 0.0
  %242 = vmatpush.msra.mxu0 0.0
  %243 = vmatpush.msra.mxu0 0.0
  %244 = vmatpush.msra.mxu0 0.0
  %245 = vmatpush.msra.mxu0 0.0
  %246 = vmatpush.msra.mxu0 0.0
  %247 = vmatpush.msra.mxu0 0.0
  %248 = vmatpush.msra.mxu0 0.0
  %249 = vmatpush.msra.mxu0 0.0
  %250 = vmatpush.msra.mxu0 0.0
  %251 = vmatpush.msra.mxu0 0.0
  %252 = vmatpush.msra.mxu0 %v227
  %253 = vmatpush.msra.mxu0 %v224
  %254 = vmatpush.msra.mxu0 %v221
  %255 = vmatpush.msra.mxu0 %v218
  %256 = vmatmul.f32.gmra.mxu0 %v238
  %v257 = vpop.f32.mrf.mxu0
  %v258 = vadd.f32 0.0, %v257
  %259 = vdwg.mxu0
  %260 = vmatpush.msra.mxu0 0.0
  %261 = vmatpush.msra.mxu0 0.0
  %262 = vmatpush.msra.mxu0 0.0
  %263 = vmatpush.msra.mxu0 0.0
  %264 = vmatpush.msra.mxu0 0.0
  %265 = vmatpush.msra.mxu0 0.0
  %266 = vmatpush.msra.mxu0 0.0
  %267 = vmatpush.msra.mxu0 0.0
  %268 = vmatpush.msra.mxu0 0.0
  %269 = vmatpush.msra.mxu0 0.0
  %270 = vmatpush.msra.mxu0 0.0
  %271 = vmatpush.msra.mxu0 0.0
  %272 = vmatpush.msra.mxu0 %v228
  %273 = vmatpush.msra.mxu0 %v225
  %274 = vmatpush.msra.mxu0 %v222
  %275 = vmatpush.msra.mxu0 %v219
  %276 = vmatmul.f32.gmra.mxu0 %v238
  %v277 = vpop.f32.mrf.mxu0
  %v278 = vadd.f32 0.0, %v277
  %279 = vdwg.mxu0
  %280 = vmatpush.msra.mxu0 0.0
  %281 = vmatpush.msra.mxu0 0.0
  %282 = vmatpush.msra.mxu0 0.0
  %283 = vmatpush.msra.mxu0 0.0
  %284 = vmatpush.msra.mxu0 0.0
  %285 = vmatpush.msra.mxu0 0.0
  %286 = vmatpush.msra.mxu0 0.0
  %287 = vmatpush.msra.mxu0 0.0
  %288 = vmatpush.msra.mxu0 0.0
  %289 = vmatpush.msra.mxu0 0.0
  %290 = vmatpush.msra.mxu0 0.0
  %291 = vmatpush.msra.mxu0 0.0
  %292 = vmatpush.msra.mxu0 %v229
  %293 = vmatpush.msra.mxu0 %v226
  %294 = vmatpush.msra.mxu0 %v223
  %295 = vmatpush.msra.mxu0 %v220
  %296 = vmatmul.f32.gmra.mxu0 %v238
  %v297 = vpop.f32.mrf.mxu0
  %v298 = vadd.f32 0.0, %v297
  %299 = vdwg.mxu0
  %v300 = vadd.f32 %v233, %v258
  %v301 = vxor.u32 %v300, 2147483648
  %v302 = vmul.f32 %v301, 1.442695
  %v303 = vpow.pop %v302
  %v304 = vadd.f32 %v303, 1.0
  %v305 = vrcp.pop %v304
  %v306 = vmul.f32 %v304, %v305
  %v307 = vsub.f32 1.0, %v306
  %v308 = vmul.f32 %v305, %v307
  %v309 = vadd.f32 %v305, %v308
  %vm310 = vweird.f32 %v304
  %vm311 = vweird.f32 %v305
  %vm312 = vmor %vm310, %vm311
  %v313 = vsel %vm312, %v305, %v309
  %v314 = vand.u32 2147483647, %v304
  %vm315 = vcmp.eq.f32.partialorder %v314, 8.507059e+37
  %v316 = vand.u32 %v304, 2147483648
  %v317 = vor.u32 1.1754944e-38, %v316
  %v318 = vsel %vm315, %v317, %v313
  %v319 = vmul.f32 1.0, %v318
  %v320 = vadd.f32 %v234, %v278
  %v321 = vxor.u32 %v320, 2147483648
  %v322 = vmul.f32 %v321, 1.442695
  %v323 = vpow.pop %v322
  %v324 = vadd.f32 %v323, 1.0
  %v325 = vrcp.pop %v324
  %v326 = vmul.f32 %v324, %v325
  %v327 = vsub.f32 1.0, %v326
  %v328 = vmul.f32 %v325, %v327
  %v329 = vadd.f32 %v325, %v328
  %vm330 = vweird.f32 %v324
  %vm331 = vweird.f32 %v325
  %vm332 = vmor %vm330, %vm331
  %v333 = vsel %vm332, %v325, %v329
  %v334 = vand.u32 2147483647, %v324
  %vm335 = vcmp.eq.f32.partialorder %v334, 8.507059e+37
  %v336 = vand.u32 %v324, 2147483648
  %v337 = vor.u32 1.1754944e-38, %v336
  %v338 = vsel %vm335, %v337, %v333
  %v339 = vmul.f32 1.0, %v338
  %v340 = vadd.f32 %v298, %v21
  %v341 = vmul.f32 %v319, %v340
  %v342 = vadd.f32 %v235, %v341
  %v343 = vtanh.pop %v342
  %v344 = vsub.f32 0.0, %v343
  %v345 = vmul.f32 %v339, %v344
  %v346 = vadd.f32 %v343, %v345
  %347 = vst.msk [vmem:[#allocation3] sm:$0xff] %vm236, %v346
  %s348 = smul.u32 1, 3
  %s349 = smul.addr %s348, 8
  %s350 = scalar_lea.vmem [#allocation2], %s349
  %v351 = vld [vmem:[%s350] sm:$0xff]
  %v352 = vld [vmem:[%s350 + $0x8] sm:$0xff]
  %v353 = vld [vmem:[%s350 + $0x10] sm:$0xff]
  %v355 = vsel %vm236, %v346, 0
  %357 = vmatpush.msra.mxu0 0.0
  %358 = vmatpush.msra.mxu0 0.0
  %359 = vmatpush.msra.mxu0 0.0
  %360 = vmatpush.msra.mxu0 0.0
  %361 = vmatpush.msra.mxu0 0.0
  %362 = vmatpush.msra.mxu0 0.0
  %363 = vmatpush.msra.mxu0 0.0
  %364 = vmatpush.msra.mxu0 0.0
  %365 = vmatpush.msra.mxu0 0.0
  %366 = vmatpush.msra.mxu0 0.0
  %367 = vmatpush.msra.mxu0 0.0
  %368 = vmatpush.msra.mxu0 0.0
  %369 = vmatpush.msra.mxu0 %v227
  %370 = vmatpush.msra.mxu0 %v224
  %371 = vmatpush.msra.mxu0 %v221
  %372 = vmatpush.msra.mxu0 %v218
  %373 = vmatmul.f32.gmra.mxu0 %v355
  %v374 = vpop.f32.mrf.mxu0
  %v375 = vadd.f32 0.0, %v374
  %376 = vdwg.mxu0
  %377 = vmatpush.msra.mxu0 0.0
  %378 = vmatpush.msra.mxu0 0.0
  %379 = vmatpush.msra.mxu0 0.0
  %380 = vmatpush.msra.mxu0 0.0
  %381 = vmatpush.msra.mxu0 0.0
  %382 = vmatpush.msra.mxu0 0.0
  %383 = vmatpush.msra.mxu0 0.0
  %384 = vmatpush.msra.mxu0 0.0
  %385 = vmatpush.msra.mxu0 0.0
  %386 = vmatpush.msra.mxu0 0.0
  %387 = vmatpush.msra.mxu0 0.0
  %388 = vmatpush.msra.mxu0 0.0
  %389 = vmatpush.msra.mxu0 %v228
  %390 = vmatpush.msra.mxu0 %v225
  %391 = vmatpush.msra.mxu0 %v222
  %392 = vmatpush.msra.mxu0 %v219
  %393 = vmatmul.f32.gmra.mxu0 %v355
  %v394 = vpop.f32.mrf.mxu0
  %v395 = vadd.f32 0.0, %v394
  %396 = vdwg.mxu0
  %397 = vmatpush.msra.mxu0 0.0
  %398 = vmatpush.msra.mxu0 0.0
  %399 = vmatpush.msra.mxu0 0.0
  %400 = vmatpush.msra.mxu0 0.0
  %401 = vmatpush.msra.mxu0 0.0
  %402 = vmatpush.msra.mxu0 0.0
  %403 = vmatpush.msra.mxu0 0.0
  %404 = vmatpush.msra.mxu0 0.0
  %405 = vmatpush.msra.mxu0 0.0
  %406 = vmatpush.msra.mxu0 0.0
  %407 = vmatpush.msra.mxu0 0.0
  %408 = vmatpush.msra.mxu0 0.0
  %409 = vmatpush.msra.mxu0 %v229
  %410 = vmatpush.msra.mxu0 %v226
  %411 = vmatpush.msra.mxu0 %v223
  %412 = vmatpush.msra.mxu0 %v220
  %413 = vmatmul.f32.gmra.mxu0 %v355
  %v414 = vpop.f32.mrf.mxu0
  %v415 = vadd.f32 0.0, %v414
  %416 = vdwg.mxu0
  %v417 = vadd.f32 %v351, %v375
  %v418 = vxor.u32 %v417, 2147483648
  %v419 = vmul.f32 %v418, 1.442695
  %v420 = vpow.pop %v419
  %v421 = vadd.f32 %v420, 1.0
  %v422 = vrcp.pop %v421
  %v423 = vmul.f32 %v421, %v422
  %v424 = vsub.f32 1.0, %v423
  %v425 = vmul.f32 %v422, %v424
  %v426 = vadd.f32 %v422, %v425
  %vm427 = vweird.f32 %v421
  %vm428 = vweird.f32 %v422
  %vm429 = vmor %vm427, %vm428
  %v430 = vsel %vm429, %v422, %v426
  %v431 = vand.u32 2147483647, %v421
  %vm432 = vcmp.eq.f32.partialorder %v431, 8.507059e+37
  %v433 = vand.u32 %v421, 2147483648
  %v434 = vor.u32 1.1754944e-38, %v433
  %v435 = vsel %vm432, %v434, %v430
  %v436 = vmul.f32 1.0, %v435
  %v437 = vadd.f32 %v352, %v395
  %v438 = vxor.u32 %v437, 2147483648
  %v439 = vmul.f32 %v438, 1.442695
  %v440 = vpow.pop %v439
  %v441 = vadd.f32 %v440, 1.0
  %v442 = vrcp.pop %v441
  %v443 = vmul.f32 %v441, %v442
  %v444 = vsub.f32 1.0, %v443
  %v445 = vmul.f32 %v442, %v444
  %v446 = vadd.f32 %v442, %v445
  %vm447 = vweird.f32 %v441
  %vm448 = vweird.f32 %v442
  %vm449 = vmor %vm447, %vm448
  %v450 = vsel %vm449, %v442, %v446
  %v451 = vand.u32 2147483647, %v441
  %vm452 = vcmp.eq.f32.partialorder %v451, 8.507059e+37
  %v453 = vand.u32 %v441, 2147483648
  %v454 = vor.u32 1.1754944e-38, %v453
  %v455 = vsel %vm452, %v454, %v450
  %v456 = vmul.f32 1.0, %v455
  %v457 = vadd.f32 %v415, %v21
  %v458 = vmul.f32 %v436, %v457
  %v459 = vadd.f32 %v353, %v458
  %v460 = vtanh.pop %v459
  %v461 = vsub.f32 %v346, %v460
  %v462 = vmul.f32 %v456, %v461
  %v463 = vadd.f32 %v460, %v462
  %s464 = scalar_lea.vmem [#allocation3], 8
  %465 = vst.msk [vmem:[%s464] sm:$0xff] %vm236, %v463
  %s466 = smul.u32 2, 3
  %s467 = smul.addr %s466, 8
  %s468 = scalar_lea.vmem [#allocation2], %s467
  %v469 = vld [vmem:[%s468] sm:$0xff]
  %v470 = vld [vmem:[%s468 + $0x8] sm:$0xff]
  %v471 = vld [vmem:[%s468 + $0x10] sm:$0xff]
  %v473 = vsel %vm236, %v463, 0
  %475 = vmatpush.msra.mxu0 0.0
  %476 = vmatpush.msra.mxu0 0.0
  %477 = vmatpush.msra.mxu0 0.0
  %478 = vmatpush.msra.mxu0 0.0
  %479 = vmatpush.msra.mxu0 0.0
  %480 = vmatpush.msra.mxu0 0.0
  %481 = vmatpush.msra.mxu0 0.0
  %482 = vmatpush.msra.mxu0 0.0
  %483 = vmatpush.msra.mxu0 0.0
  %484 = vmatpush.msra.mxu0 0.0
  %485 = vmatpush.msra.mxu0 0.0
  %486 = vmatpush.msra.mxu0 0.0
  %487 = vmatpush.msra.mxu0 %v227
  %488 = vmatpush.msra.mxu0 %v224
  %489 = vmatpush.msra.mxu0 %v221
  %490 = vmatpush.msra.mxu0 %v218
  %491 = vmatmul.f32.gmra.mxu0 %v473
  %v492 = vpop.f32.mrf.mxu0
  %v493 = vadd.f32 0.0, %v492
  %494 = vdwg.mxu0
  %495 = vmatpush.msra.mxu0 0.0
  %496 = vmatpush.msra.mxu0 0.0
  %497 = vmatpush.msra.mxu0 0.0
  %498 = vmatpush.msra.mxu0 0.0
  %499 = vmatpush.msra.mxu0 0.0
  %500 = vmatpush.msra.mxu0 0.0
  %501 = vmatpush.msra.mxu0 0.0
  %502 = vmatpush.msra.mxu0 0.0
  %503 = vmatpush.msra.mxu0 0.0
  %504 = vmatpush.msra.mxu0 0.0
  %505 = vmatpush.msra.mxu0 0.0
  %506 = vmatpush.msra.mxu0 0.0
  %507 = vmatpush.msra.mxu0 %v228
  %508 = vmatpush.msra.mxu0 %v225
  %509 = vmatpush.msra.mxu0 %v222
  %510 = vmatpush.msra.mxu0 %v219
  %511 = vmatmul.f32.gmra.mxu0 %v473
  %v512 = vpop.f32.mrf.mxu0
  %v513 = vadd.f32 0.0, %v512
  %514 = vdwg.mxu0
  %515 = vmatpush.msra.mxu0 0.0
  %516 = vmatpush.msra.mxu0 0.0
  %517 = vmatpush.msra.mxu0 0.0
  %518 = vmatpush.msra.mxu0 0.0
  %519 = vmatpush.msra.mxu0 0.0
  %520 = vmatpush.msra.mxu0 0.0
  %521 = vmatpush.msra.mxu0 0.0
  %522 = vmatpush.msra.mxu0 0.0
  %523 = vmatpush.msra.mxu0 0.0
  %524 = vmatpush.msra.mxu0 0.0
  %525 = vmatpush.msra.mxu0 0.0
  %526 = vmatpush.msra.mxu0 0.0
  %527 = vmatpush.msra.mxu0 %v229
  %528 = vmatpush.msra.mxu0 %v226
  %529 = vmatpush.msra.mxu0 %v223
  %530 = vmatpush.msra.mxu0 %v220
  %531 = vmatmul.f32.gmra.mxu0 %v473
  %v532 = vpop.f32.mrf.mxu0
  %v533 = vadd.f32 0.0, %v532
  %534 = vdwg.mxu0
  %v535 = vadd.f32 %v469, %v493
  %v536 = vxor.u32 %v535, 2147483648
  %v537 = vmul.f32 %v536, 1.442695
  %v538 = vpow.pop %v537
  %v539 = vadd.f32 %v538, 1.0
  %v540 = vrcp.pop %v539
  %v541 = vmul.f32 %v539, %v540
  %v542 = vsub.f32 1.0, %v541
  %v543 = vmul.f32 %v540, %v542
  %v544 = vadd.f32 %v540, %v543
  %vm545 = vweird.f32 %v539
  %vm546 = vweird.f32 %v540
  %vm547 = vmor %vm545, %vm546
  %v548 = vsel %vm547, %v540, %v544
  %v549 = vand.u32 2147483647, %v539
  %vm550 = vcmp.eq.f32.partialorder %v549, 8.507059e+37
  %v551 = vand.u32 %v539, 2147483648
  %v552 = vor.u32 1.1754944e-38, %v551
  %v553 = vsel %vm550, %v552, %v548
  %v554 = vmul.f32 1.0, %v553
  %v555 = vadd.f32 %v470, %v513
  %v556 = vxor.u32 %v555, 2147483648
  %v557 = vmul.f32 %v556, 1.442695
  %v558 = vpow.pop %v557
  %v559 = vadd.f32 %v558, 1.0
  %v560 = vrcp.pop %v559
  %v561 = vmul.f32 %v559, %v560
  %v562 = vsub.f32 1.0, %v561
  %v563 = vmul.f32 %v560, %v562
  %v564 = vadd.f32 %v560, %v563
  %vm565 = vweird.f32 %v559
  %vm566 = vweird.f32 %v560
  %vm567 = vmor %vm565, %vm566
  %v568 = vsel %vm567, %v560, %v564
  %v569 = vand.u32 2147483647, %v559
  %vm570 = vcmp.eq.f32.partialorder %v569, 8.507059e+37
  %v571 = vand.u32 %v559, 2147483648
  %v572 = vor.u32 1.1754944e-38, %v571
  %v573 = vsel %vm570, %v572, %v568
  %v574 = vmul.f32 1.0, %v573
  %v575 = vadd.f32 %v533, %v21
  %v576 = vmul.f32 %v554, %v575
  %v577 = vadd.f32 %v471, %v576
  %v578 = vtanh.pop %v577
  %v579 = vsub.f32 %v463, %v578
  %v580 = vmul.f32 %v574, %v579
  %v581 = vadd.f32 %v578, %v580
  %s582 = scalar_lea.vmem [#allocation3], 16
  %583 = vst.msk [vmem:[%s582] sm:$0xff] %vm236, %v581
  %s584 = smul.u32 3, 3
  %s585 = smul.addr %s584, 8
  %s586 = scalar_lea.vmem [#allocation2], %s585
  %v587 = vld [vmem:[%s586] sm:$0xff]
  %v588 = vld [vmem:[%s586 + $0x8] sm:$0xff]
  %v589 = vld [vmem:[%s586 + $0x10] sm:$0xff]
  %v591 = vsel %vm236, %v581, 0
  %593 = vmatpush.msra.mxu0 0.0
  %594 = vmatpush.msra.mxu0 0.0
  %595 = vmatpush.msra.mxu0 0.0
  %596 = vmatpush.msra.mxu0 0.0
  %597 = vmatpush.msra.mxu0 0.0
  %598 = vmatpush.msra.mxu0 0.0
  %599 = vmatpush.msra.mxu0 0.0
  %600 = vmatpush.msra.mxu0 0.0
  %601 = vmatpush.msra.mxu0 0.0
  %602 = vmatpush.msra.mxu0 0.0
  %603 = vmatpush.msra.mxu0 0.0
  %604 = vmatpush.msra.mxu0 0.0
  %605 = vmatpush.msra.mxu0 %v227
  %606 = vmatpush.msra.mxu0 %v224
  %607 = vmatpush.msra.mxu0 %v221
  %608 = vmatpush.msra.mxu0 %v218
  %609 = vmatmul.f32.gmra.mxu0 %v591
  %v610 = vpop.f32.mrf.mxu0
  %v611 = vadd.f32 0.0, %v610
  %612 = vdwg.mxu0
  %613 = vmatpush.msra.mxu0 0.0
  %614 = vmatpush.msra.mxu0 0.0
  %615 = vmatpush.msra.mxu0 0.0
  %616 = vmatpush.msra.mxu0 0.0
  %617 = vmatpush.msra.mxu0 0.0
  %618 = vmatpush.msra.mxu0 0.0
  %619 = vmatpush.msra.mxu0 0.0
  %620 = vmatpush.msra.mxu0 0.0
  %621 = vmatpush.msra.mxu0 0.0
  %622 = vmatpush.msra.mxu0 0.0
  %623 = vmatpush.msra.mxu0 0.0
  %624 = vmatpush.msra.mxu0 0.0
  %625 = vmatpush.msra.mxu0 %v228
  %626 = vmatpush.msra.mxu0 %v225
  %627 = vmatpush.msra.mxu0 %v222
  %628 = vmatpush.msra.mxu0 %v219
  %629 = vmatmul.f32.gmra.mxu0 %v591
  %v630 = vpop.f32.mrf.mxu0
  %v631 = vadd.f32 0.0, %v630
  %632 = vdwg.mxu0
  %633 = vmatpush.msra.mxu0 0.0
  %634 = vmatpush.msra.mxu0 0.0
  %635 = vmatpush.msra.mxu0 0.0
  %636 = vmatpush.msra.mxu0 0.0
  %637 = vmatpush.msra.mxu0 0.0
  %638 = vmatpush.msra.mxu0 0.0
  %639 = vmatpush.msra.mxu0 0.0
  %640 = vmatpush.msra.mxu0 0.0
  %641 = vmatpush.msra.mxu0 0.0
  %642 = vmatpush.msra.mxu0 0.0
  %643 = vmatpush.msra.mxu0 0.0
  %644 = vmatpush.msra.mxu0 0.0
  %645 = vmatpush.msra.mxu0 %v229
  %646 = vmatpush.msra.mxu0 %v226
  %647 = vmatpush.msra.mxu0 %v223
  %648 = vmatpush.msra.mxu0 %v220
  %649 = vmatmul.f32.gmra.mxu0 %v591
  %v650 = vpop.f32.mrf.mxu0
  %v651 = vadd.f32 0.0, %v650
  %652 = vdwg.mxu0
  %v653 = vadd.f32 %v587, %v611
  %v654 = vxor.u32 %v653, 2147483648
  %v655 = vmul.f32 %v654, 1.442695
  %v656 = vpow.pop %v655
  %v657 = vadd.f32 %v656, 1.0
  %v658 = vrcp.pop %v657
  %v659 = vmul.f32 %v657, %v658
  %v660 = vsub.f32 1.0, %v659
  %v661 = vmul.f32 %v658, %v660
  %v662 = vadd.f32 %v658, %v661
  %vm663 = vweird.f32 %v657
  %vm664 = vweird.f32 %v658
  %vm665 = vmor %vm663, %vm664
  %v666 = vsel %vm665, %v658, %v662
  %v667 = vand.u32 2147483647, %v657
  %vm668 = vcmp.eq.f32.partialorder %v667, 8.507059e+37
  %v669 = vand.u32 %v657, 2147483648
  %v670 = vor.u32 1.1754944e-38, %v669
  %v671 = vsel %vm668, %v670, %v666
  %v672 = vmul.f32 1.0, %v671
  %v673 = vadd.f32 %v588, %v631
  %v674 = vxor.u32 %v673, 2147483648
  %v675 = vmul.f32 %v674, 1.442695
  %v676 = vpow.pop %v675
  %v677 = vadd.f32 %v676, 1.0
  %v678 = vrcp.pop %v677
  %v679 = vmul.f32 %v677, %v678
  %v680 = vsub.f32 1.0, %v679
  %v681 = vmul.f32 %v678, %v680
  %v682 = vadd.f32 %v678, %v681
  %vm683 = vweird.f32 %v677
  %vm684 = vweird.f32 %v678
  %vm685 = vmor %vm683, %vm684
  %v686 = vsel %vm685, %v678, %v682
  %v687 = vand.u32 2147483647, %v677
  %vm688 = vcmp.eq.f32.partialorder %v687, 8.507059e+37
  %v689 = vand.u32 %v677, 2147483648
  %v690 = vor.u32 1.1754944e-38, %v689
  %v691 = vsel %vm688, %v690, %v686
  %v692 = vmul.f32 1.0, %v691
  %v693 = vadd.f32 %v651, %v21
  %v694 = vmul.f32 %v672, %v693
  %v695 = vadd.f32 %v589, %v694
  %v696 = vtanh.pop %v695
  %v697 = vsub.f32 %v581, %v696
  %v698 = vmul.f32 %v692, %v697
  %v699 = vadd.f32 %v696, %v698
  %s700 = scalar_lea.vmem [#allocation3], 24
  %701 = vst.msk [vmem:[%s700] sm:$0xff] %vm236, %v699
  %s702 = smul.u32 4, 3
  %s703 = smul.addr %s702, 8
  %s704 = scalar_lea.vmem [#allocation2], %s703
  %v705 = vld [vmem:[%s704] sm:$0xff]
  %v706 = vld [vmem:[%s704 + $0x8] sm:$0xff]
  %v707 = vld [vmem:[%s704 + $0x10] sm:$0xff]
  %v709 = vsel %vm236, %v699, 0
  %711 = vmatpush.msra.mxu0 0.0
  %712 = vmatpush.msra.mxu0 0.0
  %713 = vmatpush.msra.mxu0 0.0
  %714 = vmatpush.msra.mxu0 0.0
  %715 = vmatpush.msra.mxu0 0.0
  %716 = vmatpush.msra.mxu0 0.0
  %717 = vmatpush.msra.mxu0 0.0
  %718 = vmatpush.msra.mxu0 0.0
  %719 = vmatpush.msra.mxu0 0.0
  %720 = vmatpush.msra.mxu0 0.0
  %721 = vmatpush.msra.mxu0 0.0
  %722 = vmatpush.msra.mxu0 0.0
  %723 = vmatpush.msra.mxu0 %v227
  %724 = vmatpush.msra.mxu0 %v224
  %725 = vmatpush.msra.mxu0 %v221
  %726 = vmatpush.msra.mxu0 %v218
  %727 = vmatmul.f32.gmra.mxu0 %v709
  %v728 = vpop.f32.mrf.mxu0
  %v729 = vadd.f32 0.0, %v728
  %730 = vdwg.mxu0
  %731 = vmatpush.msra.mxu0 0.0
  %732 = vmatpush.msra.mxu0 0.0
  %733 = vmatpush.msra.mxu0 0.0
  %734 = vmatpush.msra.mxu0 0.0
  %735 = vmatpush.msra.mxu0 0.0
  %736 = vmatpush.msra.mxu0 0.0
  %737 = vmatpush.msra.mxu0 0.0
  %738 = vmatpush.msra.mxu0 0.0
  %739 = vmatpush.msra.mxu0 0.0
  %740 = vmatpush.msra.mxu0 0.0
  %741 = vmatpush.msra.mxu0 0.0
  %742 = vmatpush.msra.mxu0 0.0
  %743 = vmatpush.msra.mxu0 %v228
  %744 = vmatpush.msra.mxu0 %v225
  %745 = vmatpush.msra.mxu0 %v222
  %746 = vmatpush.msra.mxu0 %v219
  %747 = vmatmul.f32.gmra.mxu0 %v709
  %v748 = vpop.f32.mrf.mxu0
  %v749 = vadd.f32 0.0, %v748
  %750 = vdwg.mxu0
  %751 = vmatpush.msra.mxu0 0.0
  %752 = vmatpush.msra.mxu0 0.0
  %753 = vmatpush.msra.mxu0 0.0
  %754 = vmatpush.msra.mxu0 0.0
  %755 = vmatpush.msra.mxu0 0.0
  %756 = vmatpush.msra.mxu0 0.0
  %757 = vmatpush.msra.mxu0 0.0
  %758 = vmatpush.msra.mxu0 0.0
  %759 = vmatpush.msra.mxu0 0.0
  %760 = vmatpush.msra.mxu0 0.0
  %761 = vmatpush.msra.mxu0 0.0
  %762 = vmatpush.msra.mxu0 0.0
  %763 = vmatpush.msra.mxu0 %v229
  %764 = vmatpush.msra.mxu0 %v226
  %765 = vmatpush.msra.mxu0 %v223
  %766 = vmatpush.msra.mxu0 %v220
  %767 = vmatmul.f32.gmra.mxu0 %v709
  %v768 = vpop.f32.mrf.mxu0
  %v769 = vadd.f32 0.0, %v768
  %770 = vdwg.mxu0
  %v771 = vadd.f32 %v705, %v729
  %v772 = vxor.u32 %v771, 2147483648
  %v773 = vmul.f32 %v772, 1.442695
  %v774 = vpow.pop %v773
  %v775 = vadd.f32 %v774, 1.0
  %v776 = vrcp.pop %v775
  %v777 = vmul.f32 %v775, %v776
  %v778 = vsub.f32 1.0, %v777
  %v779 = vmul.f32 %v776, %v778
  %v780 = vadd.f32 %v776, %v779
  %vm781 = vweird.f32 %v775
  %vm782 = vweird.f32 %v776
  %vm783 = vmor %vm781, %vm782
  %v784 = vsel %vm783, %v776, %v780
  %v785 = vand.u32 2147483647, %v775
  %vm786 = vcmp.eq.f32.partialorder %v785, 8.507059e+37
  %v787 = vand.u32 %v775, 2147483648
  %v788 = vor.u32 1.1754944e-38, %v787
  %v789 = vsel %vm786, %v788, %v784
  %v790 = vmul.f32 1.0, %v789
  %v791 = vadd.f32 %v706, %v749
  %v792 = vxor.u32 %v791, 2147483648
  %v793 = vmul.f32 %v792, 1.442695
  %v794 = vpow.pop %v793
  %v795 = vadd.f32 %v794, 1.0
  %v796 = vrcp.pop %v795
  %v797 = vmul.f32 %v795, %v796
  %v798 = vsub.f32 1.0, %v797
  %v799 = vmul.f32 %v796, %v798
  %v800 = vadd.f32 %v796, %v799
  %vm801 = vweird.f32 %v795
  %vm802 = vweird.f32 %v796
  %vm803 = vmor %vm801, %vm802
  %v804 = vsel %vm803, %v796, %v800
  %v805 = vand.u32 2147483647, %v795
  %vm806 = vcmp.eq.f32.partialorder %v805, 8.507059e+37
  %v807 = vand.u32 %v795, 2147483648
  %v808 = vor.u32 1.1754944e-38, %v807
  %v809 = vsel %vm806, %v808, %v804
  %v810 = vmul.f32 1.0, %v809
  %v811 = vadd.f32 %v769, %v21
  %v812 = vmul.f32 %v790, %v811
  %v813 = vadd.f32 %v707, %v812
  %v814 = vtanh.pop %v813
  %v815 = vsub.f32 %v699, %v814
  %v816 = vmul.f32 %v810, %v815
  %v817 = vadd.f32 %v814, %v816
  %s818 = scalar_lea.vmem [#allocation3], 32
  %819 = vst.msk [vmem:[%s818] sm:$0xff] %vm236, %v817
  %s820 = smul.u32 5, 3
  %s821 = smul.addr %s820, 8
  %s822 = scalar_lea.vmem [#allocation2], %s821
  %v823 = vld [vmem:[%s822] sm:$0xff]
  %v824 = vld [vmem:[%s822 + $0x8] sm:$0xff]
  %v825 = vld [vmem:[%s822 + $0x10] sm:$0xff]
  %v827 = vsel %vm236, %v817, 0
  %829 = vmatpush.msra.mxu0 0.0
  %830 = vmatpush.msra.mxu0 0.0
  %831 = vmatpush.msra.mxu0 0.0
  %832 = vmatpush.msra.mxu0 0.0
  %833 = vmatpush.msra.mxu0 0.0
  %834 = vmatpush.msra.mxu0 0.0
  %835 = vmatpush.msra.mxu0 0.0
  %836 = vmatpush.msra.mxu0 0.0
  %837 = vmatpush.msra.mxu0 0.0
  %838 = vmatpush.msra.mxu0 0.0
  %839 = vmatpush.msra.mxu0 0.0
  %840 = vmatpush.msra.mxu0 0.0
  %841 = vmatpush.msra.mxu0 %v227
  %842 = vmatpush.msra.mxu0 %v224
  %843 = vmatpush.msra.mxu0 %v221
  %844 = vmatpush.msra.mxu0 %v218
  %845 = vmatmul.f32.gmra.mxu0 %v827
  %v846 = vpop.f32.mrf.mxu0
  %v847 = vadd.f32 0.0, %v846
  %848 = vdwg.mxu0
  %849 = vmatpush.msra.mxu0 0.0
  %850 = vmatpush.msra.mxu0 0.0
  %851 = vmatpush.msra.mxu0 0.0
  %852 = vmatpush.msra.mxu0 0.0
  %853 = vmatpush.msra.mxu0 0.0
  %854 = vmatpush.msra.mxu0 0.0
  %855 = vmatpush.msra.mxu0 0.0
  %856 = vmatpush.msra.mxu0 0.0
  %857 = vmatpush.msra.mxu0 0.0
  %858 = vmatpush.msra.mxu0 0.0
  %859 = vmatpush.msra.mxu0 0.0
  %860 = vmatpush.msra.mxu0 0.0
  %861 = vmatpush.msra.mxu0 %v228
  %862 = vmatpush.msra.mxu0 %v225
  %863 = vmatpush.msra.mxu0 %v222
  %864 = vmatpush.msra.mxu0 %v219
  %865 = vmatmul.f32.gmra.mxu0 %v827
  %v866 = vpop.f32.mrf.mxu0
  %v867 = vadd.f32 0.0, %v866
  %868 = vdwg.mxu0
  %869 = vmatpush.msra.mxu0 0.0
  %870 = vmatpush.msra.mxu0 0.0
  %871 = vmatpush.msra.mxu0 0.0
  %872 = vmatpush.msra.mxu0 0.0
  %873 = vmatpush.msra.mxu0 0.0
  %874 = vmatpush.msra.mxu0 0.0
  %875 = vmatpush.msra.mxu0 0.0
  %876 = vmatpush.msra.mxu0 0.0
  %877 = vmatpush.msra.mxu0 0.0
  %878 = vmatpush.msra.mxu0 0.0
  %879 = vmatpush.msra.mxu0 0.0
  %880 = vmatpush.msra.mxu0 0.0
  %881 = vmatpush.msra.mxu0 %v229
  %882 = vmatpush.msra.mxu0 %v226
  %883 = vmatpush.msra.mxu0 %v223
  %884 = vmatpush.msra.mxu0 %v220
  %885 = vmatmul.f32.gmra.mxu0 %v827
  %v886 = vpop.f32.mrf.mxu0
  %v887 = vadd.f32 0.0, %v886
  %888 = vdwg.mxu0
  %v889 = vadd.f32 %v823, %v847
  %v890 = vxor.u32 %v889, 2147483648
  %v891 = vmul.f32 %v890, 1.442695
  %v892 = vpow.pop %v891
  %v893 = vadd.f32 %v892, 1.0
  %v894 = vrcp.pop %v893
  %v895 = vmul.f32 %v893, %v894
  %v896 = vsub.f32 1.0, %v895
  %v897 = vmul.f32 %v894, %v896
  %v898 = vadd.f32 %v894, %v897
  %vm899 = vweird.f32 %v893
  %vm900 = vweird.f32 %v894
  %vm901 = vmor %vm899, %vm900
  %v902 = vsel %vm901, %v894, %v898
  %v903 = vand.u32 2147483647, %v893
  %vm904 = vcmp.eq.f32.partialorder %v903, 8.507059e+37
  %v905 = vand.u32 %v893, 2147483648
  %v906 = vor.u32 1.1754944e-38, %v905
  %v907 = vsel %vm904, %v906, %v902
  %v908 = vmul.f32 1.0, %v907
  %v909 = vadd.f32 %v824, %v867
  %v910 = vxor.u32 %v909, 2147483648
  %v911 = vmul.f32 %v910, 1.442695
  %v912 = vpow.pop %v911
  %v913 = vadd.f32 %v912, 1.0
  %v914 = vrcp.pop %v913
  %v915 = vmul.f32 %v913, %v914
  %v916 = vsub.f32 1.0, %v915
  %v917 = vmul.f32 %v914, %v916
  %v918 = vadd.f32 %v914, %v917
  %vm919 = vweird.f32 %v913
  %vm920 = vweird.f32 %v914
  %vm921 = vmor %vm919, %vm920
  %v922 = vsel %vm921, %v914, %v918
  %v923 = vand.u32 2147483647, %v913
  %vm924 = vcmp.eq.f32.partialorder %v923, 8.507059e+37
  %v925 = vand.u32 %v913, 2147483648
  %v926 = vor.u32 1.1754944e-38, %v925
  %v927 = vsel %vm924, %v926, %v922
  %v928 = vmul.f32 1.0, %v927
  %v929 = vadd.f32 %v887, %v21
  %v930 = vmul.f32 %v908, %v929
  %v931 = vadd.f32 %v825, %v930
  %v932 = vtanh.pop %v931
  %v933 = vsub.f32 %v817, %v932
  %v934 = vmul.f32 %v928, %v933
  %v935 = vadd.f32 %v932, %v934
  %s936 = scalar_lea.vmem [#allocation3], 40
  %937 = vst.msk [vmem:[%s936] sm:$0xff] %vm236, %v935
  %s938 = smul.u32 6, 3
  %s939 = smul.addr %s938, 8
  %s940 = scalar_lea.vmem [#allocation2], %s939
  %v941 = vld [vmem:[%s940] sm:$0xff]
  %v942 = vld [vmem:[%s940 + $0x8] sm:$0xff]
  %v943 = vld [vmem:[%s940 + $0x10] sm:$0xff]
  %v945 = vsel %vm236, %v935, 0
  %947 = vmatpush.msra.mxu0 0.0
  %948 = vmatpush.msra.mxu0 0.0
  %949 = vmatpush.msra.mxu0 0.0
  %950 = vmatpush.msra.mxu0 0.0
  %951 = vmatpush.msra.mxu0 0.0
  %952 = vmatpush.msra.mxu0 0.0
  %953 = vmatpush.msra.mxu0 0.0
  %954 = vmatpush.msra.mxu0 0.0
  %955 = vmatpush.msra.mxu0 0.0
  %956 = vmatpush.msra.mxu0 0.0
  %957 = vmatpush.msra.mxu0 0.0
  %958 = vmatpush.msra.mxu0 0.0
  %959 = vmatpush.msra.mxu0 %v227
  %960 = vmatpush.msra.mxu0 %v224
  %961 = vmatpush.msra.mxu0 %v221
  %962 = vmatpush.msra.mxu0 %v218
  %963 = vmatmul.f32.gmra.mxu0 %v945
  %v964 = vpop.f32.mrf.mxu0
  %v965 = vadd.f32 0.0, %v964
  %966 = vdwg.mxu0
  %967 = vmatpush.msra.mxu0 0.0
  %968 = vmatpush.msra.mxu0 0.0
  %969 = vmatpush.msra.mxu0 0.0
  %970 = vmatpush.msra.mxu0 0.0
  %971 = vmatpush.msra.mxu0 0.0
  %972 = vmatpush.msra.mxu0 0.0
  %973 = vmatpush.msra.mxu0 0.0
  %974 = vmatpush.msra.mxu0 0.0
  %975 = vmatpush.msra.mxu0 0.0
  %976 = vmatpush.msra.mxu0 0.0
  %977 = vmatpush.msra.mxu0 0.0
  %978 = vmatpush.msra.mxu0 0.0
  %979 = vmatpush.msra.mxu0 %v228
  %980 = vmatpush.msra.mxu0 %v225
  %981 = vmatpush.msra.mxu0 %v222
  %982 = vmatpush.msra.mxu0 %v219
  %983 = vmatmul.f32.gmra.mxu0 %v945
  %v984 = vpop.f32.mrf.mxu0
  %v985 = vadd.f32 0.0, %v984
  %986 = vdwg.mxu0
  %987 = vmatpush.msra.mxu0 0.0
  %988 = vmatpush.msra.mxu0 0.0
  %989 = vmatpush.msra.mxu0 0.0
  %990 = vmatpush.msra.mxu0 0.0
  %991 = vmatpush.msra.mxu0 0.0
  %992 = vmatpush.msra.mxu0 0.0
  %993 = vmatpush.msra.mxu0 0.0
  %994 = vmatpush.msra.mxu0 0.0
  %995 = vmatpush.msra.mxu0 0.0
  %996 = vmatpush.msra.mxu0 0.0
  %997 = vmatpush.msra.mxu0 0.0
  %998 = vmatpush.msra.mxu0 0.0
  %999 = vmatpush.msra.mxu0 %v229
  %1000 = vmatpush.msra.mxu0 %v226
  %1001 = vmatpush.msra.mxu0 %v223
  %1002 = vmatpush.msra.mxu0 %v220
  %1003 = vmatmul.f32.gmra.mxu0 %v945
  %v1004 = vpop.f32.mrf.mxu0
  %v1005 = vadd.f32 0.0, %v1004
  %1006 = vdwg.mxu0
  %v1007 = vadd.f32 %v941, %v965
  %v1008 = vxor.u32 %v1007, 2147483648
  %v1009 = vmul.f32 %v1008, 1.442695
  %v1010 = vpow.pop %v1009
  %v1011 = vadd.f32 %v1010, 1.0
  %v1012 = vrcp.pop %v1011
  %v1013 = vmul.f32 %v1011, %v1012
  %v1014 = vsub.f32 1.0, %v1013
  %v1015 = vmul.f32 %v1012, %v1014
  %v1016 = vadd.f32 %v1012, %v1015
  %vm1017 = vweird.f32 %v1011
  %vm1018 = vweird.f32 %v1012
  %vm1019 = vmor %vm1017, %vm1018
  %v1020 = vsel %vm1019, %v1012, %v1016
  %v1021 = vand.u32 2147483647, %v1011
  %vm1022 = vcmp.eq.f32.partialorder %v1021, 8.507059e+37
  %v1023 = vand.u32 %v1011, 2147483648
  %v1024 = vor.u32 1.1754944e-38, %v1023
  %v1025 = vsel %vm1022, %v1024, %v1020
  %v1026 = vmul.f32 1.0, %v1025
  %v1027 = vadd.f32 %v942, %v985
  %v1028 = vxor.u32 %v1027, 2147483648
  %v1029 = vmul.f32 %v1028, 1.442695
  %v1030 = vpow.pop %v1029
  %v1031 = vadd.f32 %v1030, 1.0
  %v1032 = vrcp.pop %v1031
  %v1033 = vmul.f32 %v1031, %v1032
  %v1034 = vsub.f32 1.0, %v1033
  %v1035 = vmul.f32 %v1032, %v1034
  %v1036 = vadd.f32 %v1032, %v1035
  %vm1037 = vweird.f32 %v1031
  %vm1038 = vweird.f32 %v1032
  %vm1039 = vmor %vm1037, %vm1038
  %v1040 = vsel %vm1039, %v1032, %v1036
  %v1041 = vand.u32 2147483647, %v1031
  %vm1042 = vcmp.eq.f32.partialorder %v1041, 8.507059e+37
  %v1043 = vand.u32 %v1031, 2147483648
  %v1044 = vor.u32 1.1754944e-38, %v1043
  %v1045 = vsel %vm1042, %v1044, %v1040
  %v1046 = vmul.f32 1.0, %v1045
  %v1047 = vadd.f32 %v1005, %v21
  %v1048 = vmul.f32 %v1026, %v1047
  %v1049 = vadd.f32 %v943, %v1048
  %v1050 = vtanh.pop %v1049
  %v1051 = vsub.f32 %v935, %v1050
  %v1052 = vmul.f32 %v1046, %v1051
  %v1053 = vadd.f32 %v1050, %v1052
  %s1054 = scalar_lea.vmem [#allocation3], 48
  %1055 = vst.msk [vmem:[%s1054] sm:$0xff] %vm236, %v1053
  %s1056 = smul.u32 7, 3
  %s1057 = smul.addr %s1056, 8
  %s1058 = scalar_lea.vmem [#allocation2], %s1057
  %v1059 = vld [vmem:[%s1058] sm:$0xff]
  %v1060 = vld [vmem:[%s1058 + $0x8] sm:$0xff]
  %v1061 = vld [vmem:[%s1058 + $0x10] sm:$0xff]
  %v1063 = vsel %vm236, %v1053, 0
  %1065 = vmatpush.msra.mxu0 0.0
  %1066 = vmatpush.msra.mxu0 0.0
  %1067 = vmatpush.msra.mxu0 0.0
  %1068 = vmatpush.msra.mxu0 0.0
  %1069 = vmatpush.msra.mxu0 0.0
  %1070 = vmatpush.msra.mxu0 0.0
  %1071 = vmatpush.msra.mxu0 0.0
  %1072 = vmatpush.msra.mxu0 0.0
  %1073 = vmatpush.msra.mxu0 0.0
  %1074 = vmatpush.msra.mxu0 0.0
  %1075 = vmatpush.msra.mxu0 0.0
  %1076 = vmatpush.msra.mxu0 0.0
  %1077 = vmatpush.msra.mxu0 %v227
  %1078 = vmatpush.msra.mxu0 %v224
  %1079 = vmatpush.msra.mxu0 %v221
  %1080 = vmatpush.msra.mxu0 %v218
  %1081 = vmatmul.f32.gmra.mxu0 %v1063
  %v1082 = vpop.f32.mrf.mxu0
  %v1083 = vadd.f32 0.0, %v1082
  %1084 = vdwg.mxu0
  %1085 = vmatpush.msra.mxu0 0.0
  %1086 = vmatpush.msra.mxu0 0.0
  %1087 = vmatpush.msra.mxu0 0.0
  %1088 = vmatpush.msra.mxu0 0.0
  %1089 = vmatpush.msra.mxu0 0.0
  %1090 = vmatpush.msra.mxu0 0.0
  %1091 = vmatpush.msra.mxu0 0.0
  %1092 = vmatpush.msra.mxu0 0.0
  %1093 = vmatpush.msra.mxu0 0.0
  %1094 = vmatpush.msra.mxu0 0.0
  %1095 = vmatpush.msra.mxu0 0.0
  %1096 = vmatpush.msra.mxu0 0.0
  %1097 = vmatpush.msra.mxu0 %v228
  %1098 = vmatpush.msra.mxu0 %v225
  %1099 = vmatpush.msra.mxu0 %v222
  %1100 = vmatpush.msra.mxu0 %v219
  %1101 = vmatmul.f32.gmra.mxu0 %v1063
  %v1102 = vpop.f32.mrf.mxu0
  %v1103 = vadd.f32 0.0, %v1102
  %1104 = vdwg.mxu0
  %1105 = vmatpush.msra.mxu0 0.0
  %1106 = vmatpush.msra.mxu0 0.0
  %1107 = vmatpush.msra.mxu0 0.0
  %1108 = vmatpush.msra.mxu0 0.0
  %1109 = vmatpush.msra.mxu0 0.0
  %1110 = vmatpush.msra.mxu0 0.0
  %1111 = vmatpush.msra.mxu0 0.0
  %1112 = vmatpush.msra.mxu0 0.0
  %1113 = vmatpush.msra.mxu0 0.0
  %1114 = vmatpush.msra.mxu0 0.0
  %1115 = vmatpush.msra.mxu0 0.0
  %1116 = vmatpush.msra.mxu0 0.0
  %1117 = vmatpush.msra.mxu0 %v229
  %1118 = vmatpush.msra.mxu0 %v226
  %1119 = vmatpush.msra.mxu0 %v223
  %1120 = vmatpush.msra.mxu0 %v220
  %1121 = vmatmul.f32.gmra.mxu0 %v1063
  %v1122 = vpop.f32.mrf.mxu0
  %v1123 = vadd.f32 0.0, %v1122
  %1124 = vdwg.mxu0
  %v1125 = vadd.f32 %v1059, %v1083
  %v1126 = vxor.u32 %v1125, 2147483648
  %v1127 = vmul.f32 %v1126, 1.442695
  %v1128 = vpow.pop %v1127
  %v1129 = vadd.f32 %v1128, 1.0
  %v1130 = vrcp.pop %v1129
  %v1131 = vmul.f32 %v1129, %v1130
  %v1132 = vsub.f32 1.0, %v1131
  %v1133 = vmul.f32 %v1130, %v1132
  %v1134 = vadd.f32 %v1130, %v1133
  %vm1135 = vweird.f32 %v1129
  %vm1136 = vweird.f32 %v1130
  %vm1137 = vmor %vm1135, %vm1136
  %v1138 = vsel %vm1137, %v1130, %v1134
  %v1139 = vand.u32 2147483647, %v1129
  %vm1140 = vcmp.eq.f32.partialorder %v1139, 8.507059e+37
  %v1141 = vand.u32 %v1129, 2147483648
  %v1142 = vor.u32 1.1754944e-38, %v1141
  %v1143 = vsel %vm1140, %v1142, %v1138
  %v1144 = vmul.f32 1.0, %v1143
  %v1145 = vadd.f32 %v1060, %v1103
  %v1146 = vxor.u32 %v1145, 2147483648
  %v1147 = vmul.f32 %v1146, 1.442695
  %v1148 = vpow.pop %v1147
  %v1149 = vadd.f32 %v1148, 1.0
  %v1150 = vrcp.pop %v1149
  %v1151 = vmul.f32 %v1149, %v1150
  %v1152 = vsub.f32 1.0, %v1151
  %v1153 = vmul.f32 %v1150, %v1152
  %v1154 = vadd.f32 %v1150, %v1153
  %vm1155 = vweird.f32 %v1149
  %vm1156 = vweird.f32 %v1150
  %vm1157 = vmor %vm1155, %vm1156
  %v1158 = vsel %vm1157, %v1150, %v1154
  %v1159 = vand.u32 2147483647, %v1149
  %vm1160 = vcmp.eq.f32.partialorder %v1159, 8.507059e+37
  %v1161 = vand.u32 %v1149, 2147483648
  %v1162 = vor.u32 1.1754944e-38, %v1161
  %v1163 = vsel %vm1160, %v1162, %v1158
  %v1164 = vmul.f32 1.0, %v1163
  %v1165 = vadd.f32 %v1123, %v21
  %v1166 = vmul.f32 %v1144, %v1165
  %v1167 = vadd.f32 %v1061, %v1166
  %v1168 = vtanh.pop %v1167
  %v1169 = vsub.f32 %v1053, %v1168
  %v1170 = vmul.f32 %v1164, %v1169
  %v1171 = vadd.f32 %v1168, %v1170
  %s1172 = scalar_lea.vmem [#allocation3], 56
  %1173 = vst.msk [vmem:[%s1172] sm:$0xff] %vm236, %v1171
  %v1174 = vld [vmem:[#allocation3] sm:$0xff]
  %v1175 = vld [vmem:[#allocation3 + $0x8] sm:$0xff]
  %v1176 = vld [vmem:[#allocation3 + $0x10] sm:$0xff]
  %v1177 = vld [vmem:[#allocation3 + $0x18] sm:$0xff]
  %v1178 = vld [vmem:[#allocation3 + $0x20] sm:$0xff]
  %v1179 = vld [vmem:[#allocation3 + $0x28] sm:$0xff]
  %v1180 = vld [vmem:[#allocation3 + $0x30] sm:$0xff]
  %v1181 = vld [vmem:[#allocation3 + $0x38] sm:$0xff]
  %v1182 = vsel %vm236, %v1174, 0.0
  %1183 = vadd.xlane.f32.xlu0 %v1182
  %v1184 = vpop.xlane.xlu0 %1183
  %v1185 = vsel %vm236, %v1175, 0.0
  %1186 = vadd.xlane.f32.xlu0 %v1185
  %v1187 = vpop.xlane.xlu0 %1186
  %v1188 = vsel %vm236, %v1176, 0.0
  %1189 = vadd.xlane.f32.xlu0 %v1188
  %v1190 = vpop.xlane.xlu0 %1189
  %v1191 = vsel %vm236, %v1177, 0.0
  %1192 = vadd.xlane.f32.xlu0 %v1191
  %v1193 = vpop.xlane.xlu0 %1192
  %v1194 = vsel %vm236, %v1178, 0.0
  %1195 = vadd.xlane.f32.xlu0 %v1194
  %v1196 = vpop.xlane.xlu0 %1195
  %v1197 = vsel %vm236, %v1179, 0.0
  %1198 = vadd.xlane.f32.xlu0 %v1197
  %v1199 = vpop.xlane.xlu0 %1198
  %v1200 = vsel %vm236, %v1180, 0.0
  %1201 = vadd.xlane.f32.xlu0 %v1200
  %v1202 = vpop.xlane.xlu0 %1201
  %v1203 = vsel %vm236, %v1181, 0.0
  %1204 = vadd.xlane.f32.xlu0 %v1203
  %v1205 = vpop.xlane.xlu0 %1204
  %v1206 = vrcp.pop 32.0
  %v1207 = vmul.f32 32.0, %v1206
  %v1208 = vsub.f32 1.0, %v1207
  %v1209 = vmul.f32 %v1206, %v1208
  %v1210 = vadd.f32 %v1206, %v1209
  %vm1211 = vweird.f32 %v1206
  %v1212 = vsel %vm1211, %v1206, %v1210
  %v1213 = vmul.f32 %v1184, %v1212
  %v1214 = vmul.f32 %v1187, %v1212
  %v1215 = vmul.f32 %v1190, %v1212
  %v1216 = vmul.f32 %v1193, %v1212
  %v1217 = vmul.f32 %v1196, %v1212
  %v1218 = vmul.f32 %v1199, %v1212
  %v1219 = vmul.f32 %v1202, %v1212
  %v1220 = vmul.f32 %v1205, %v1212
  %v1221 = vsub.f32 %v1174, %v1213
  %v1222 = vsub.f32 %v1175, %v1214
  %v1223 = vsub.f32 %v1176, %v1215
  %v1224 = vsub.f32 %v1177, %v1216
  %v1225 = vsub.f32 %v1178, %v1217
  %v1226 = vsub.f32 %v1179, %v1218
  %v1227 = vsub.f32 %v1180, %v1219
  %v1228 = vsub.f32 %v1181, %v1220
  %v1229 = vmul.f32 %v1221, %v1221
  %v1230 = vmul.f32 %v1222, %v1222
  %v1231 = vmul.f32 %v1223, %v1223
  %v1232 = vmul.f32 %v1224, %v1224
  %v1233 = vmul.f32 %v1225, %v1225
  %v1234 = vmul.f32 %v1226, %v1226
  %v1235 = vmul.f32 %v1227, %v1227
  %v1236 = vmul.f32 %v1228, %v1228
  %v1237 = vsel %vm236, %v1229, 0.0
  %1238 = vadd.xlane.f32.xlu0 %v1237
  %v1239 = vpop.xlane.xlu0 %1238
  %v1240 = vsel %vm236, %v1230, 0.0
  %1241 = vadd.xlane.f32.xlu0 %v1240
  %v1242 = vpop.xlane.xlu0 %1241
  %v1243 = vsel %vm236, %v1231, 0.0
  %1244 = vadd.xlane.f32.xlu0 %v1243
  %v1245 = vpop.xlane.xlu0 %1244
  %v1246 = vsel %vm236, %v1232, 0.0
  %1247 = vadd.xlane.f32.xlu0 %v1246
  %v1248 = vpop.xlane.xlu0 %1247
  %v1249 = vsel %vm236, %v1233, 0.0
  %1250 = vadd.xlane.f32.xlu0 %v1249
  %v1251 = vpop.xlane.xlu0 %1250
  %v1252 = vsel %vm236, %v1234, 0.0
  %1253 = vadd.xlane.f32.xlu0 %v1252
  %v1254 = vpop.xlane.xlu0 %1253
  %v1255 = vsel %vm236, %v1235, 0.0
  %1256 = vadd.xlane.f32.xlu0 %v1255
  %v1257 = vpop.xlane.xlu0 %1256
  %v1258 = vsel %vm236, %v1236, 0.0
  %1259 = vadd.xlane.f32.xlu0 %v1258
  %v1260 = vpop.xlane.xlu0 %1259
  %v1261 = vmul.f32 %v1239, %v1212
  %v1262 = vmul.f32 %v1242, %v1212
  %v1263 = vmul.f32 %v1245, %v1212
  %v1264 = vmul.f32 %v1248, %v1212
  %v1265 = vmul.f32 %v1251, %v1212
  %v1266 = vmul.f32 %v1254, %v1212
  %v1267 = vmul.f32 %v1257, %v1212
  %v1268 = vmul.f32 %v1260, %v1212
  %v1269 = vadd.f32 %v1261, 1e-05
  %v1270 = vadd.f32 %v1262, 1e-05
  %v1271 = vadd.f32 %v1263, 1e-05
  %v1272 = vadd.f32 %v1264, 1e-05
  %v1273 = vadd.f32 %v1265, 1e-05
  %v1274 = vadd.f32 %v1266, 1e-05
  %v1275 = vadd.f32 %v1267, 1e-05
  %v1276 = vadd.f32 %v1268, 1e-05
  %v1277 = vrsqrt.pop %v1269
  %v1278 = vmul.f32 %v1277, %v1269
  %v1279 = vmul.f32 %v1278, %v1277
  %v1280 = vmul.f32 0.5, %v1279
  %v1281 = vsub.f32 1.5, %v1280
  %v1282 = vmul.f32 %v1277, %v1281
  %vm1283 = vweird.f32 %v1269
  %vm1284 = vweird.f32 %v1277
  %vm1285 = vmor %vm1283, %vm1284
  %v1286 = vsel %vm1285, %v1277, %v1282
  %v1287 = vrsqrt.pop %v1270
  %v1288 = vmul.f32 %v1287, %v1270
  %v1289 = vmul.f32 %v1288, %v1287
  %v1290 = vmul.f32 0.5, %v1289
  %v1291 = vsub.f32 1.5, %v1290
  %v1292 = vmul.f32 %v1287, %v1291
  %vm1293 = vweird.f32 %v1270
  %vm1294 = vweird.f32 %v1287
  %vm1295 = vmor %vm1293, %vm1294
  %v1296 = vsel %vm1295, %v1287, %v1292
  %v1297 = vrsqrt.pop %v1271
  %v1298 = vmul.f32 %v1297, %v1271
  %v1299 = vmul.f32 %v1298, %v1297
  %v1300 = vmul.f32 0.5, %v1299
  %v1301 = vsub.f32 1.5, %v1300
  %v1302 = vmul.f32 %v1297, %v1301
  %vm1303 = vweird.f32 %v1271
  %vm1304 = vweird.f32 %v1297
  %vm1305 = vmor %vm1303, %vm1304
  %v1306 = vsel %vm1305, %v1297, %v1302
  %v1307 = vrsqrt.pop %v1272
  %v1308 = vmul.f32 %v1307, %v1272
  %v1309 = vmul.f32 %v1308, %v1307
  %v1310 = vmul.f32 0.5, %v1309
  %v1311 = vsub.f32 1.5, %v1310
  %v1312 = vmul.f32 %v1307, %v1311
  %vm1313 = vweird.f32 %v1272
  %vm1314 = vweird.f32 %v1307
  %vm1315 = vmor %vm1313, %vm1314
  %v1316 = vsel %vm1315, %v1307, %v1312
  %v1317 = vrsqrt.pop %v1273
  %v1318 = vmul.f32 %v1317, %v1273
  %v1319 = vmul.f32 %v1318, %v1317
  %v1320 = vmul.f32 0.5, %v1319
  %v1321 = vsub.f32 1.5, %v1320
  %v1322 = vmul.f32 %v1317, %v1321
  %vm1323 = vweird.f32 %v1273
  %vm1324 = vweird.f32 %v1317
  %vm1325 = vmor %vm1323, %vm1324
  %v1326 = vsel %vm1325, %v1317, %v1322
  %v1327 = vrsqrt.pop %v1274
  %v1328 = vmul.f32 %v1327, %v1274
  %v1329 = vmul.f32 %v1328, %v1327
  %v1330 = vmul.f32 0.5, %v1329
  %v1331 = vsub.f32 1.5, %v1330
  %v1332 = vmul.f32 %v1327, %v1331
  %vm1333 = vweird.f32 %v1274
  %vm1334 = vweird.f32 %v1327
  %vm1335 = vmor %vm1333, %vm1334
  %v1336 = vsel %vm1335, %v1327, %v1332
  %v1337 = vrsqrt.pop %v1275
  %v1338 = vmul.f32 %v1337, %v1275
  %v1339 = vmul.f32 %v1338, %v1337
  %v1340 = vmul.f32 0.5, %v1339
  %v1341 = vsub.f32 1.5, %v1340
  %v1342 = vmul.f32 %v1337, %v1341
  %vm1343 = vweird.f32 %v1275
  %vm1344 = vweird.f32 %v1337
  %vm1345 = vmor %vm1343, %vm1344
  %v1346 = vsel %vm1345, %v1337, %v1342
  %v1347 = vrsqrt.pop %v1276
  %v1348 = vmul.f32 %v1347, %v1276
  %v1349 = vmul.f32 %v1348, %v1347
  %v1350 = vmul.f32 0.5, %v1349
  %v1351 = vsub.f32 1.5, %v1350
  %v1352 = vmul.f32 %v1347, %v1351
  %vm1353 = vweird.f32 %v1276
  %vm1354 = vweird.f32 %v1347
  %vm1355 = vmor %vm1353, %vm1354
  %v1356 = vsel %vm1355, %v1347, %v1352
  %v1357 = vmul.f32 %v1221, %v1286
  %v1358 = vmul.f32 %v1222, %v1296
  %v1359 = vmul.f32 %v1223, %v1306
  %v1360 = vmul.f32 %v1224, %v1316
  %v1361 = vmul.f32 %v1225, %v1326
  %v1362 = vmul.f32 %v1226, %v1336
  %v1363 = vmul.f32 %v1227, %v1346
  %v1364 = vmul.f32 %v1228, %v1356
  %v1365 = vmul.f32 %v1357, %v22
  %v1366 = vmul.f32 %v1358, %v22
  %v1367 = vmul.f32 %v1359, %v22
  %v1368 = vmul.f32 %v1360, %v22
  %v1369 = vmul.f32 %v1361, %v22
  %v1370 = vmul.f32 %v1362, %v22
  %v1371 = vmul.f32 %v1363, %v22
  %v1372 = vmul.f32 %v1364, %v22
  %v1373 = vadd.f32 %v1365, %v23
  %v1374 = vadd.f32 %v1366, %v23
  %v1375 = vadd.f32 %v1367, %v23
  %v1376 = vadd.f32 %v1368, %v23
  %v1377 = vadd.f32 %v1369, %v23
  %v1378 = vadd.f32 %v1370, %v23
  %v1379 = vadd.f32 %v1371, %v23
  %v1380 = vadd.f32 %v1372, %v23
  %v1381 = vld [vmem:[%s3] sm:$0xff]
  %v1382 = vld [vmem:[%s3 + $0x8] sm:$0xff]
  %v1383 = vld [vmem:[%s3 + $0x10] sm:$0xff]
  %v1384 = vld [vmem:[%s3 + $0x18] sm:$0xff]
  %v1386 = vsel %vm236, %v1373, 0
  %v1389 = vsel %vm236, %v1374, 0
  %v1392 = vsel %vm236, %v1375, 0
  %v1395 = vsel %vm236, %v1376, 0
  %v1398 = vsel %vm236, %v1377, 0
  %v1401 = vsel %vm236, %v1378, 0
  %v1404 = vsel %vm236, %v1379, 0
  %v1407 = vsel %vm236, %v1380, 0
  %1409 = vmatpush.msra.mxu0 0.0
  %1410 = vmatpush.msra.mxu0 0.0
  %1411 = vmatpush.msra.mxu0 0.0
  %1412 = vmatpush.msra.mxu0 0.0
  %1413 = vmatpush.msra.mxu0 0.0
  %1414 = vmatpush.msra.mxu0 0.0
  %1415 = vmatpush.msra.mxu0 0.0
  %1416 = vmatpush.msra.mxu0 0.0
  %1417 = vmatpush.msra.mxu0 0.0
  %1418 = vmatpush.msra.mxu0 0.0
  %1419 = vmatpush.msra.mxu0 0.0
  %1420 = vmatpush.msra.mxu0 0.0
  %1421 = vmatpush.msra.mxu0 %v1384
  %1422 = vmatpush.msra.mxu0 %v1383
  %1423 = vmatpush.msra.mxu0 %v1382
  %1424 = vmatpush.msra.mxu0 %v1381
  %1425 = vmatmul.f32.gmra.mxu0 %v1386
  %v1426 = vpop.f32.mrf.mxu0
  %v1427 = vadd.f32 %v24, %v1426
  %1428 = vmatmul.f32.gmra.mxu0 %v1389
  %v1429 = vpop.f32.mrf.mxu0
  %v1430 = vadd.f32 %v24, %v1429
  %1431 = vmatmul.f32.gmra.mxu0 %v1392
  %v1432 = vpop.f32.mrf.mxu0
  %v1433 = vadd.f32 %v24, %v1432
  %1434 = vmatmul.f32.gmra.mxu0 %v1395
  %v1435 = vpop.f32.mrf.mxu0
  %v1436 = vadd.f32 %v24, %v1435
  %1437 = vmatmul.f32.gmra.mxu0 %v1398
  %v1438 = vpop.f32.mrf.mxu0
  %v1439 = vadd.f32 %v24, %v1438
  %1440 = vmatmul.f32.gmra.mxu0 %v1401
  %v1441 = vpop.f32.mrf.mxu0
  %v1442 = vadd.f32 %v24, %v1441
  %1443 = vmatmul.f32.gmra.mxu0 %v1404
  %v1444 = vpop.f32.mrf.mxu0
  %v1445 = vadd.f32 %v24, %v1444
  %1446 = vmatmul.f32.gmra.mxu0 %v1407
  %v1447 = vpop.f32.mrf.mxu0
  %v1448 = vadd.f32 %v24, %v1447
  %1449 = vdwg.mxu0
  %v1450 = vxor.u32 %v1427, 2147483648
  %v1451 = vxor.u32 %v1430, 2147483648
  %v1452 = vxor.u32 %v1433, 2147483648
  %v1453 = vxor.u32 %v1436, 2147483648
  %v1454 = vxor.u32 %v1439, 2147483648
  %v1455 = vxor.u32 %v1442, 2147483648
  %v1456 = vxor.u32 %v1445, 2147483648
  %v1457 = vxor.u32 %v1448, 2147483648
  %v1458 = vmul.f32 %v1450, 1.442695
  %v1459 = vpow.pop %v1458
  %v1460 = vmul.f32 %v1451, 1.442695
  %v1461 = vpow.pop %v1460
  %v1462 = vmul.f32 %v1452, 1.442695
  %v1463 = vpow.pop %v1462
  %v1464 = vmul.f32 %v1453, 1.442695
  %v1465 = vpow.pop %v1464
  %v1466 = vmul.f32 %v1454, 1.442695
  %v1467 = vpow.pop %v1466
  %v1468 = vmul.f32 %v1455, 1.442695
  %v1469 = vpow.pop %v1468
  %v1470 = vmul.f32 %v1456, 1.442695
  %v1471 = vpow.pop %v1470
  %v1472 = vmul.f32 %v1457, 1.442695
  %v1473 = vpow.pop %v1472
  %v1474 = vadd.f32 %v1459, 1.0
  %v1475 = vadd.f32 %v1461, 1.0
  %v1476 = vadd.f32 %v1463, 1.0
  %v1477 = vadd.f32 %v1465, 1.0
  %v1478 = vadd.f32 %v1467, 1.0
  %v1479 = vadd.f32 %v1469, 1.0
  %v1480 = vadd.f32 %v1471, 1.0
  %v1481 = vadd.f32 %v1473, 1.0
  %v1482 = vrcp.pop %v1474
  %v1483 = vmul.f32 %v1474, %v1482
  %v1484 = vsub.f32 1.0, %v1483
  %v1485 = vmul.f32 %v1482, %v1484
  %v1486 = vadd.f32 %v1482, %v1485
  %vm1487 = vweird.f32 %v1474
  %vm1488 = vweird.f32 %v1482
  %vm1489 = vmor %vm1487, %vm1488
  %v1490 = vsel %vm1489, %v1482, %v1486
  %v1491 = vand.u32 2147483647, %v1474
  %vm1492 = vcmp.eq.f32.partialorder %v1491, 8.507059e+37
  %v1493 = vand.u32 %v1474, 2147483648
  %v1494 = vor.u32 1.1754944e-38, %v1493
  %v1495 = vsel %vm1492, %v1494, %v1490
  %v1496 = vmul.f32 1.0, %v1495
  %v1497 = vrcp.pop %v1475
  %v1498 = vmul.f32 %v1475, %v1497
  %v1499 = vsub.f32 1.0, %v1498
  %v1500 = vmul.f32 %v1497, %v1499
  %v1501 = vadd.f32 %v1497, %v1500
  %vm1502 = vweird.f32 %v1475
  %vm1503 = vweird.f32 %v1497
  %vm1504 = vmor %vm1502, %vm1503
  %v1505 = vsel %vm1504, %v1497, %v1501
  %v1506 = vand.u32 2147483647, %v1475
  %vm1507 = vcmp.eq.f32.partialorder %v1506, 8.507059e+37
  %v1508 = vand.u32 %v1475, 2147483648
  %v1509 = vor.u32 1.1754944e-38, %v1508
  %v1510 = vsel %vm1507, %v1509, %v1505
  %v1511 = vmul.f32 1.0, %v1510
  %v1512 = vrcp.pop %v1476
  %v1513 = vmul.f32 %v1476, %v1512
  %v1514 = vsub.f32 1.0, %v1513
  %v1515 = vmul.f32 %v1512, %v1514
  %v1516 = vadd.f32 %v1512, %v1515
  %vm1517 = vweird.f32 %v1476
  %vm1518 = vweird.f32 %v1512
  %vm1519 = vmor %vm1517, %vm1518
  %v1520 = vsel %vm1519, %v1512, %v1516
  %v1521 = vand.u32 2147483647, %v1476
  %vm1522 = vcmp.eq.f32.partialorder %v1521, 8.507059e+37
  %v1523 = vand.u32 %v1476, 2147483648
  %v1524 = vor.u32 1.1754944e-38, %v1523
  %v1525 = vsel %vm1522, %v1524, %v1520
  %v1526 = vmul.f32 1.0, %v1525
  %v1527 = vrcp.pop %v1477
  %v1528 = vmul.f32 %v1477, %v1527
  %v1529 = vsub.f32 1.0, %v1528
  %v1530 = vmul.f32 %v1527, %v1529
  %v1531 = vadd.f32 %v1527, %v1530
  %vm1532 = vweird.f32 %v1477
  %vm1533 = vweird.f32 %v1527
  %vm1534 = vmor %vm1532, %vm1533
  %v1535 = vsel %vm1534, %v1527, %v1531
  %v1536 = vand.u32 2147483647, %v1477
  %vm1537 = vcmp.eq.f32.partialorder %v1536, 8.507059e+37
  %v1538 = vand.u32 %v1477, 2147483648
  %v1539 = vor.u32 1.1754944e-38, %v1538
  %v1540 = vsel %vm1537, %v1539, %v1535
  %v1541 = vmul.f32 1.0, %v1540
  %v1542 = vrcp.pop %v1478
  %v1543 = vmul.f32 %v1478, %v1542
  %v1544 = vsub.f32 1.0, %v1543
  %v1545 = vmul.f32 %v1542, %v1544
  %v1546 = vadd.f32 %v1542, %v1545
  %vm1547 = vweird.f32 %v1478
  %vm1548 = vweird.f32 %v1542
  %vm1549 = vmor %vm1547, %vm1548
  %v1550 = vsel %vm1549, %v1542, %v1546
  %v1551 = vand.u32 2147483647, %v1478
  %vm1552 = vcmp.eq.f32.partialorder %v1551, 8.507059e+37
  %v1553 = vand.u32 %v1478, 2147483648
  %v1554 = vor.u32 1.1754944e-38, %v1553
  %v1555 = vsel %vm1552, %v1554, %v1550
  %v1556 = vmul.f32 1.0, %v1555
  %v1557 = vrcp.pop %v1479
  %v1558 = vmul.f32 %v1479, %v1557
  %v1559 = vsub.f32 1.0, %v1558
  %v1560 = vmul.f32 %v1557, %v1559
  %v1561 = vadd.f32 %v1557, %v1560
  %vm1562 = vweird.f32 %v1479
  %vm1563 = vweird.f32 %v1557
  %vm1564 = vmor %vm1562, %vm1563
  %v1565 = vsel %vm1564, %v1557, %v1561
  %v1566 = vand.u32 2147483647, %v1479
  %vm1567 = vcmp.eq.f32.partialorder %v1566, 8.507059e+37
  %v1568 = vand.u32 %v1479, 2147483648
  %v1569 = vor.u32 1.1754944e-38, %v1568
  %v1570 = vsel %vm1567, %v1569, %v1565
  %v1571 = vmul.f32 1.0, %v1570
  %v1572 = vrcp.pop %v1480
  %v1573 = vmul.f32 %v1480, %v1572
  %v1574 = vsub.f32 1.0, %v1573
  %v1575 = vmul.f32 %v1572, %v1574
  %v1576 = vadd.f32 %v1572, %v1575
  %vm1577 = vweird.f32 %v1480
  %vm1578 = vweird.f32 %v1572
  %vm1579 = vmor %vm1577, %vm1578
  %v1580 = vsel %vm1579, %v1572, %v1576
  %v1581 = vand.u32 2147483647, %v1480
  %vm1582 = vcmp.eq.f32.partialorder %v1581, 8.507059e+37
  %v1583 = vand.u32 %v1480, 2147483648
  %v1584 = vor.u32 1.1754944e-38, %v1583
  %v1585 = vsel %vm1582, %v1584, %v1580
  %v1586 = vmul.f32 1.0, %v1585
  %v1587 = vrcp.pop %v1481
  %v1588 = vmul.f32 %v1481, %v1587
  %v1589 = vsub.f32 1.0, %v1588
  %v1590 = vmul.f32 %v1587, %v1589
  %v1591 = vadd.f32 %v1587, %v1590
  %vm1592 = vweird.f32 %v1481
  %vm1593 = vweird.f32 %v1587
  %vm1594 = vmor %vm1592, %vm1593
  %v1595 = vsel %vm1594, %v1587, %v1591
  %v1596 = vand.u32 2147483647, %v1481
  %vm1597 = vcmp.eq.f32.partialorder %v1596, 8.507059e+37
  %v1598 = vand.u32 %v1481, 2147483648
  %v1599 = vor.u32 1.1754944e-38, %v1598
  %v1600 = vsel %vm1597, %v1599, %v1595
  %v1601 = vmul.f32 1.0, %v1600
  %1602 = vst [vmem:[%s5] sm:$0xff] %v1496
  %1603 = vst [vmem:[%s5 + $0x8] sm:$0xff] %v1511
  %1604 = vst [vmem:[%s5 + $0x10] sm:$0xff] %v1526
  %1605 = vst [vmem:[%s5 + $0x18] sm:$0xff] %v1541
  %1606 = vst [vmem:[%s5 + $0x20] sm:$0xff] %v1556
  %1607 = vst [vmem:[%s5 + $0x28] sm:$0xff] %v1571
  %1608 = vst [vmem:[%s5 + $0x30] sm:$0xff] %v1586
  %1609 = vst [vmem:[%s5 + $0x38] sm:$0xff] %v1601
  // Predicated region
  $region22: #{gru_model_forward.1} parent=0 // pred_check
    _
  $region23: #{gru_model_forward.1} parent=0 // pred_check_branch
    %1611 = sbr.rel (0) target = $region25
  $region24: #{gru_model_forward.1} parent=0 // pred_region
    _
  $region25: #{gru_model_forward.1} parent=0 // pred_fallthru
    _
  // Predicated region
  $region26: #{gru_model_forward.1} parent=0 // pred_check
    _
  $region27: #{gru_model_forward.1} parent=0 // pred_check_branch
    %1613 = sbr.rel (0) target = $region29
  $region28: #{gru_model_forward.1} parent=0 // pred_region
    _
  $region29: #{gru_model_forward.1} parent=0 // pred_fallthru
    _

</llo_original>
